<compile_context>
chip_gen: v7x
topology: tpu7x:2x2x1
jax: 0.10.0
libtpu: 0.0.40
codegen_flags: <defaults>
</compile_context>

<pallas_src>
import jax
import jax.numpy as jnp
from jax.experimental import pallas as pl
from jax.experimental.pallas import tpu as pltpu


# ------------------------------------------------ weight prep (plain JAX) ---

def _band_conv_weight(w, width, compute_dtype):
    """(3, 3, Cin, Cout) HWIO -> (3, width*Cin, width*Cout) banded matrices.

    M[dy, (wo+dx-1)*Cin + ci, wo*Cout + co] = w[dy, dx, ci, co]; taps with
    wo+dx-1 outside [0, width) are dropped, which implements the horizontal
    SAME zero padding.  One-time weight prep; hoist out of the hot path.
    """
    kh, kw, cin, cout = w.shape
    eye = jnp.eye(width, dtype=w.dtype)
    blocks = jnp.einsum("uv,hkic->hkuivc", eye, w).reshape(
        kh, kw, width * cin, width * cout)
    m = jnp.zeros((kh, width * cin, width * cout), w.dtype)
    for dx in range(kw):
        blk = blocks[:, dx]
        shift = (dx - (kw // 2)) * cin          # input col = out col + dx - 1
        if shift > 0:
            blk = jnp.concatenate(
                [jnp.zeros((kh, shift, width * cout), w.dtype),
                 blk[:, :-shift]], axis=1)
        elif shift < 0:
            blk = jnp.concatenate(
                [blk[:, -shift:],
                 jnp.zeros((kh, -shift, width * cout), w.dtype)], axis=1)
        m = m + blk
    return m.astype(compute_dtype)


def _band_skip_weight(wskip, width, compute_dtype):
    """(Cin, Cout) 1x1-conv weight -> (width*Cin, width*Cout) block diagonal."""
    cin, cout = wskip.shape
    eye = jnp.eye(width, dtype=wskip.dtype)
    m = jnp.einsum("uv,ic->uivc", eye, wskip).reshape(width * cin, width * cout)
    return m.astype(compute_dtype)


def prepare_block_params(params, width, compute_dtype=jnp.bfloat16):
    """One-time parameter prep (do once per model, outside the hot path).

    Returns banded matmul weights + tiled f32 biases.  When the block has a
    1x1-conv skip, its block-diagonal weight is fused onto conv1's output
    columns (zero columns for dy=0 and dy=2) so the kernel gets the skip for
    free out of conv1's dy=1 dot.
    """
    w1, b1, w2, b2, w3, b3, wskip = params
    cdt = compute_dtype
    cout = w1.shape[-1]
    has_skip = wskip is not None

    m1 = _band_conv_weight(w1, width, cdt)      # (3, W*Cin , W*Cout)
    m2 = _band_conv_weight(w2, width, cdt)      # (3, W*Cout, W*Cout)
    m3 = _band_conv_weight(w3, width, cdt)      # (3, W*Cout, W*Cout)
    if has_skip:
        msk = _band_skip_weight(wskip, width, cdt)          # (W*Cin, W*Cout)
        zero = jnp.zeros_like(msk)
        # conv1 dy=1 columns [W*Cout:] compute the 1x1-conv skip.
        m1 = jnp.concatenate([m1, jnp.stack([zero, msk, zero])], axis=-1)

    def tile_bias(b):
        return jnp.tile(b.astype(jnp.float32), width).reshape(1, width * cout)

    return dict(m1=m1, b1=tile_bias(b1), m2=m2, b2=tile_bias(b2),
                m3=m3, b3=tile_bias(b3),
                has_skip=has_skip, cout=cout, compute_dtype=cdt)


# ----------------------------------------------------------------- kernel ---

def _make_block_kernel(NB, H, WCout, has_skip):
    """Fused Block kernel for one grid step of NB stacked images."""
    S = H + 2                     # per-image slot: halo | H rows | halo
    R = NB * S                    # stacked padded buffer height
    M = R - 2                     # matmul M dim of every conv dot

    def kernel(x_ref, m1_ref, b1_ref, m2_ref, b2_ref, m3_ref, b3_ref,
               o_ref, xbuf, h1buf, h2buf, *rest):
        skip_sc = rest[0] if has_skip else None
        cdt = xbuf.dtype          # matmul-operand / activation-buffer dtype

        # Zero the halo/separator rows once: the scratches persist across grid
        # steps and nothing below ever writes those rows.  Requires the grid
        # axis to be "arbitrary" (sequential on one core); for a v7x 2-TC
        # sharded grid, zero the halo rows every step instead.
        @pl.when(pl.program_id(0) == 0)
        def _():
            xbuf[...] = jnp.zeros_like(xbuf)
            h1buf[...] = jnp.zeros_like(h1buf)
            h2buf[...] = jnp.zeros_like(h2buf)

        def conv_stack(buf, m_ref):
            # One MXU dot per kernel row dy over the WHOLE image stack; the dx
            # taps + horizontal SAME padding live in the banded weight.  f32
            # accumulation starts at the first dot (no zeros+add pass).
            acc = jnp.dot(buf[0:M, :], m_ref[0],
                          preferred_element_type=jnp.float32)
            acc = acc + jnp.dot(buf[1:M + 1, :], m_ref[1],
                                preferred_element_type=jnp.float32)
            acc = acc + jnp.dot(buf[2:M + 2, :], m_ref[2],
                                preferred_element_type=jnp.float32)
            return acc

        def scatter_interiors(buf, stacked):
            # Keep the H valid rows of each image (drop the garbage boundary
            # rows) and store them into that image's padded slot.
            for i in range(NB):
                buf[i * S + 1: i * S + 1 + H, :] = \
                    stacked[i * S: i * S + H, :].astype(cdt)

        # stage x (f32 at the boundary) into the padded stack as cdt operands
        for i in range(NB):
            xbuf[i * S + 1: i * S + 1 + H, :] = x_ref[i].astype(cdt)

        # conv1 (+ fused 1x1-conv skip columns), bias, ReLU
        acc1 = conv_stack(xbuf, m1_ref)
        if has_skip:
            skip_sc[...] = acc1[:, WCout:]       # park skip (f32) until the end
            acc1 = acc1[:, :WCout]
        scatter_interiors(h1buf, jnp.maximum(acc1 + b1_ref[0], 0.0))

        # conv2, bias, ReLU
        scatter_interiors(
            h2buf, jnp.maximum(conv_stack(h1buf, m2_ref) + b2_ref[0], 0.0))

        # conv3 + bias + skip + ReLU
        acc3 = conv_stack(h2buf, m3_ref) + b3_ref[0]
        for i in range(NB):
            y = acc3[i * S: i * S + H, :]
            if has_skip:
                y = y + skip_sc[i * S: i * S + H, :]
            else:
                y = y + x_ref[i].astype(jnp.float32)   # identity skip, f32 x
            o_ref[i] = jnp.maximum(y, 0.0).astype(o_ref.dtype)

    return kernel


# ---------------------------------------------------------------- wrapper ---

def block_forward(x, prepped, *, images_per_step=None):
    """Pallas TAESD Block forward.

    x: (N, H, W, Cin) NHWC float32 (PyTorch NCHW == x.transpose(0, 2, 3, 1)).
    prepped: output of prepare_block_params(params, W, compute_dtype).
    images_per_step: images folded into each grid step's matmuls (defaults to
        the whole batch -> grid=(1,)).  Pick a smaller value only to create
        >=2 grid steps, e.g. when sharding across v7x's two TensorCores.
    """
    N, H, W, Cin = x.shape
    Cout = prepped["cout"]
    has_skip = prepped["has_skip"]
    cdt = prepped["compute_dtype"]
    m1, m2, m3 = prepped["m1"], prepped["m2"], prepped["m3"]
    b1, b2, b3 = prepped["b1"], prepped["b2"], prepped["b3"]
    assert has_skip or Cin == Cout

    NB = N if images_per_step is None else int(images_per_step)
    assert N % NB == 0, (N, NB)
    num_steps = N // NB

    WCin, WCout = W * Cin, W * Cout
    Ncol1 = m1.shape[-1]            # W*Cout, or 2*W*Cout with the fused skip
    S = H + 2
    R = NB * S
    M = R - 2

    # lane-dense activation layout: fold W into the lane dim (free reshape)
    x_flat = x.reshape(N, H, WCin)

    in_specs = [
        pl.BlockSpec((NB, H, WCin), lambda s: (s, 0, 0)),
        pl.BlockSpec((3, WCin, Ncol1), lambda s: (0, 0, 0)),
        pl.BlockSpec((1, WCout), lambda s: (0, 0)),
        pl.BlockSpec((3, WCout, WCout), lambda s: (0, 0, 0)),
        pl.BlockSpec((1, WCout), lambda s: (0, 0)),
        pl.BlockSpec((3, WCout, WCout), lambda s: (0, 0, 0)),
        pl.BlockSpec((1, WCout), lambda s: (0, 0)),
    ]
    scratch_shapes = [
        pltpu.VMEM((R, WCin), cdt),      # padded, stacked x
        pltpu.VMEM((R, WCout), cdt),     # padded, stacked h1
        pltpu.VMEM((R, WCout), cdt),     # padded, stacked h2
    ]
    if has_skip:
        scratch_shapes.append(pltpu.VMEM((M, WCout), jnp.float32))  # fused skip

    def nbytes(a):
        return a.size * a.dtype.itemsize

    flops = 2 * num_steps * M * (3 * WCin * Ncol1 + 6 * WCout * WCout)
    bytes_accessed = int(nbytes(x_flat) + nbytes(m1) + nbytes(m2) + nbytes(m3)
                         + nbytes(b1) + nbytes(b2) + nbytes(b3)
                         + N * H * WCout * jnp.dtype(x.dtype).itemsize)

    out = pl.pallas_call(
        _make_block_kernel(NB, H, WCout, has_skip),
        out_shape=jax.ShapeDtypeStruct((N, H, WCout), x.dtype),
        grid=(num_steps,),
        in_specs=in_specs,
        out_specs=pl.BlockSpec((NB, H, WCout), lambda s: (s, 0, 0)),
        scratch_shapes=scratch_shapes,
        compiler_params=pltpu.CompilerParams(
            # "arbitrary": the zero-once halo init makes steps depend on the
            # persistent scratch; see the kernel note for the v7x 2-TC plan.
            dimension_semantics=("arbitrary",)),
        cost_estimate=pl.CostEstimate(
            flops=int(flops), transcendentals=0,
            bytes_accessed=bytes_accessed),
    )(x_flat, m1, b1, m2, b2, m3, b3)

    return out.reshape(N, H, W, Cout)      # free reshape back to NHWC


# ------------------------------------------------------ pure-JAX reference ---

def block_reference(x, params, compute_dtype=jnp.float32):
    """Reference via lax.conv; rounds matmul operands to compute_dtype at the
    same points as the kernel so the bf16 path is directly comparable."""
    w1, b1, w2, b2, w3, b3, wskip = params
    cdt = compute_dtype

    def conv(h, w, b):
        y = jax.lax.conv_general_dilated(
            h.astype(cdt), w.astype(cdt), window_strides=(1, 1),
            padding="SAME", dimension_numbers=("NHWC", "HWIO", "NHWC"),
            preferred_element_type=jnp.float32)
        return y + b.astype(jnp.float32)

    h = jax.nn.relu(conv(x, w1, b1))
    h = jax.nn.relu(conv(h, w2, b2))
    y = conv(h, w3, b3)
    if wskip is not None:
        skip = jnp.einsum("nhwc,co->nhwo", x.astype(cdt), wskip.astype(cdt),
                          preferred_element_type=jnp.float32)
    else:
        skip = x.astype(jnp.float32)        # identity skip stays f32
    return jax.nn.relu(y + skip)


# ------------------------------------------------------------------- main ---

if __name__ == "__main__":
    root = jax.random.PRNGKey(0)
    k_x1, k_p1, k_x2, k_p2 = jax.random.split(root, 4)

    def make_params(key, c_in, c_out):
        ks = jax.random.split(key, 7)
        w1 = jax.random.normal(ks[0], (3, 3, c_in, c_out), jnp.float32) * 0.1
        b1 = jax.random.normal(ks[1], (c_out,), jnp.float32) * 0.1
        w2 = jax.random.normal(ks[2], (3, 3, c_out, c_out), jnp.float32) * 0.1
        b2 = jax.random.normal(ks[3], (c_out,), jnp.float32) * 0.1
        w3 = jax.random.normal(ks[4], (3, 3, c_out, c_out), jnp.float32) * 0.1
        b3 = jax.random.normal(ks[5], (c_out,), jnp.float32) * 0.1
        wskip = (jax.random.normal(ks[6], (c_in, c_out), jnp.float32) * 0.1
                 if c_in != c_out else None)     # nn.Identity() skip
        return (w1, b1, w2, b2, w3, b3, wskip)

    # Case 1: n_in != n_out (fused 1x1-conv skip), f32 compute, whole batch
    # folded into one grid step's matmuls.  Strict check.
    N, Cin, Cout, H, W = 2, 4, 8, 16, 16
    x = jax.random.normal(k_x1, (N, H, W, Cin), jnp.float32)
    params = make_params(k_p1, Cin, Cout)

    prepped_f32 = prepare_block_params(params, W, jnp.float32)
    out_f32 = jax.block_until_ready(block_forward(x, prepped_f32))
    ref_f32 = jax.block_until_ready(block_reference(x, params, jnp.float32))
    assert out_f32.shape == (N, H, W, Cout), out_f32.shape
    assert jnp.allclose(out_f32, ref_f32, atol=1e-4, rtol=1e-4), \
        float(jnp.max(jnp.abs(out_f32 - ref_f32)))

    # Case 2: bf16 matmul operands (MXU fast path) + a 2-step grid
    # (images_per_step=1) to exercise the persistent-scratch / zero-once path.
    prepped_bf = prepare_block_params(params, W, jnp.bfloat16)
    out_bf = jax.block_until_ready(
        block_forward(x, prepped_bf, images_per_step=1))
    ref_bf = jax.block_until_ready(block_reference(x, params, jnp.bfloat16))
    assert jnp.allclose(out_bf, ref_bf, atol=1e-2, rtol=1e-2), \
        float(jnp.max(jnp.abs(out_bf - ref_bf)))

    # Case 3: n_in == n_out -> identity skip (direct f32 add, no skip matmul).
    C = 8
    x2 = jax.random.normal(k_x2, (N, H, W, C), jnp.float32)
    params2 = make_params(k_p2, C, C)
    prepped_id = prepare_block_params(params2, W, jnp.float32)
    out_id = jax.block_until_ready(block_forward(x2, prepped_id))
    ref_id = jax.block_until_ready(block_reference(x2, params2, jnp.float32))
    assert jnp.allclose(out_id, ref_id, atol=1e-4, rtol=1e-4), \
        float(jnp.max(jnp.abs(out_id - ref_id)))

    print("KERNEL_OK")
</pallas_src>

<mosaic_0001>
module attributes {stable_mosaic.version = 11 : i64} {
  func.func @kernel(%arg0: i32, %arg1: memref<2x16x64xf32, #tpu.memory_space<vmem>>, %arg2: memref<3x64x256xf32, #tpu.memory_space<vmem>>, %arg3: memref<1x128xf32, #tpu.memory_space<vmem>>, %arg4: memref<3x128x128xf32, #tpu.memory_space<vmem>>, %arg5: memref<1x128xf32, #tpu.memory_space<vmem>>, %arg6: memref<3x128x128xf32, #tpu.memory_space<vmem>>, %arg7: memref<1x128xf32, #tpu.memory_space<vmem>>, %arg8: memref<2x16x128xf32, #tpu.memory_space<vmem>>, %arg9: memref<36x64xf32, #tpu.memory_space<vmem>>, %arg10: memref<36x128xf32, #tpu.memory_space<vmem>>, %arg11: memref<36x128xf32, #tpu.memory_space<vmem>>, %arg12: memref<34x128xf32, #tpu.memory_space<vmem>>) attributes {dimension_semantics = [#tpu.dimension_semantics<arbitrary>], iteration_bounds = array<i64: 1>, scalar_prefetch = 0 : i64, scratch_operands = 4 : i64, tpu.core_type = #tpu.core_type<tc>, window_params = [{transform_indices = @transform_0, window_bounds = array<i64: 2, 16, 64>}, {pipeline_mode = #tpu.pipeline_mode<synchronous>, transform_indices = @transform_1, window_bounds = array<i64: 3, 64, 256>}, {pipeline_mode = #tpu.pipeline_mode<synchronous>, transform_indices = @transform_2, window_bounds = array<i64: 1, 128>}, {pipeline_mode = #tpu.pipeline_mode<synchronous>, transform_indices = @transform_3, window_bounds = array<i64: 3, 128, 128>}, {pipeline_mode = #tpu.pipeline_mode<synchronous>, transform_indices = @transform_4, window_bounds = array<i64: 1, 128>}, {pipeline_mode = #tpu.pipeline_mode<synchronous>, transform_indices = @transform_5, window_bounds = array<i64: 3, 128, 128>}, {pipeline_mode = #tpu.pipeline_mode<synchronous>, transform_indices = @transform_6, window_bounds = array<i64: 1, 128>}, {transform_indices = @transform_7, window_bounds = array<i64: 2, 16, 128>}]} {
    %c0_i32 = arith.constant 0 : i32
    %0 = arith.cmpi eq, %arg0, %c0_i32 : i32
    %1 = arith.extui %0 : i1 to i32
    %c0_i32_0 = arith.constant 0 : i32
    %2 = arith.cmpi ne, %1, %c0_i32_0 : i32
    scf.if %2 {
      %cst_89 = arith.constant 0.000000e+00 : f32
      %97 = vector.broadcast %cst_89 : f32 to vector<36x64xf32>
      %c0_90 = arith.constant 0 : index
      %c0_91 = arith.constant 0 : index
      %98 = vector.load %arg9[%c0_90, %c0_91] : memref<36x64xf32, #tpu.memory_space<vmem>>, vector<36x64xf32>
      tpu.vector_store %arg9[%c0_90, %c0_91], %97 {strides = array<i32>} : memref<36x64xf32, #tpu.memory_space<vmem>>, vector<36x64xf32>,
      %cst_92 = arith.constant 0.000000e+00 : f32
      %99 = vector.broadcast %cst_92 : f32 to vector<36x128xf32>
      %c0_93 = arith.constant 0 : index
      %c0_94 = arith.constant 0 : index
      %100 = vector.load %arg10[%c0_93, %c0_94] : memref<36x128xf32, #tpu.memory_space<vmem>>, vector<36x128xf32>
      tpu.vector_store %arg10[%c0_93, %c0_94], %99 {strides = array<i32>} : memref<36x128xf32, #tpu.memory_space<vmem>>, vector<36x128xf32>,
      %cst_95 = arith.constant 0.000000e+00 : f32
      %101 = vector.broadcast %cst_95 : f32 to vector<36x128xf32>
      %c0_96 = arith.constant 0 : index
      %c0_97 = arith.constant 0 : index
      %102 = vector.load %arg11[%c0_96, %c0_97] : memref<36x128xf32, #tpu.memory_space<vmem>>, vector<36x128xf32>
      tpu.vector_store %arg11[%c0_96, %c0_97], %101 {strides = array<i32>} : memref<36x128xf32, #tpu.memory_space<vmem>>, vector<36x128xf32>,
    } else {
    }
    %c0 = arith.constant 0 : index
    %c0_1 = arith.constant 0 : index
    %c0_2 = arith.constant 0 : index
    %3 = vector.load %arg1[%c0, %c0_1, %c0_2] : memref<2x16x64xf32, #tpu.memory_space<vmem>>, vector<1x16x64xf32>
    %4 = vector.shape_cast %3 : vector<1x16x64xf32> to vector<16x64xf32>
    %c1 = arith.constant 1 : index
    %c0_3 = arith.constant 0 : index
    %5 = vector.load %arg9[%c1, %c0_3] : memref<36x64xf32, #tpu.memory_space<vmem>>, vector<16x64xf32>
    tpu.vector_store %arg9[%c1, %c0_3], %4 {strides = array<i32>} : memref<36x64xf32, #tpu.memory_space<vmem>>, vector<16x64xf32>,
    %c1_4 = arith.constant 1 : index
    %c0_5 = arith.constant 0 : index
    %c0_6 = arith.constant 0 : index
    %6 = vector.load %arg1[%c1_4, %c0_5, %c0_6] : memref<2x16x64xf32, #tpu.memory_space<vmem>>, vector<1x16x64xf32>
    %7 = vector.shape_cast %6 : vector<1x16x64xf32> to vector<16x64xf32>
    %c19 = arith.constant 19 : index
    %c0_7 = arith.constant 0 : index
    %8 = vector.load %arg9[%c19, %c0_7] : memref<36x64xf32, #tpu.memory_space<vmem>>, vector<16x64xf32>
    tpu.vector_store %arg9[%c19, %c0_7], %7 {strides = array<i32>} : memref<36x64xf32, #tpu.memory_space<vmem>>, vector<16x64xf32>,
    %c0_8 = arith.constant 0 : index
    %c0_9 = arith.constant 0 : index
    %9 = vector.load %arg9[%c0_8, %c0_9] : memref<36x64xf32, #tpu.memory_space<vmem>>, vector<34x64xf32>
    %c0_10 = arith.constant 0 : index
    %c0_11 = arith.constant 0 : index
    %c0_12 = arith.constant 0 : index
    %10 = vector.load %arg2[%c0_10, %c0_11, %c0_12] : memref<3x64x256xf32, #tpu.memory_space<vmem>>, vector<1x64x256xf32>
    %11 = vector.shape_cast %10 : vector<1x64x256xf32> to vector<64x256xf32>
    %cst = arith.constant dense<0.000000e+00> : vector<34x256xf32>
    %12 = tpu.matmul %9, %11, %cst {dimension_numbers = #tpu.dot_dimension_numbers<[1], [0], [0], [1], [0, 0, 1, 1], [], []>} : vector<34x64xf32>, vector<64x256xf32>, vector<34x256xf32> -> vector<34x256xf32>
    %c1_13 = arith.constant 1 : index
    %c0_14 = arith.constant 0 : index
    %13 = vector.load %arg9[%c1_13, %c0_14] : memref<36x64xf32, #tpu.memory_space<vmem>>, vector<34x64xf32>
    %c1_15 = arith.constant 1 : index
    %c0_16 = arith.constant 0 : index
    %c0_17 = arith.constant 0 : index
    %14 = vector.load %arg2[%c1_15, %c0_16, %c0_17] : memref<3x64x256xf32, #tpu.memory_space<vmem>>, vector<1x64x256xf32>
    %15 = vector.shape_cast %14 : vector<1x64x256xf32> to vector<64x256xf32>
    %cst_18 = arith.constant dense<0.000000e+00> : vector<34x256xf32>
    %16 = tpu.matmul %13, %15, %cst_18 {dimension_numbers = #tpu.dot_dimension_numbers<[1], [0], [0], [1], [0, 0, 1, 1], [], []>} : vector<34x64xf32>, vector<64x256xf32>, vector<34x256xf32> -> vector<34x256xf32>
    %17 = arith.addf %12, %16 : vector<34x256xf32>
    %c2 = arith.constant 2 : index
    %c0_19 = arith.constant 0 : index
    %18 = vector.load %arg9[%c2, %c0_19] : memref<36x64xf32, #tpu.memory_space<vmem>>, vector<34x64xf32>
    %c2_20 = arith.constant 2 : index
    %c0_21 = arith.constant 0 : index
    %c0_22 = arith.constant 0 : index
    %19 = vector.load %arg2[%c2_20, %c0_21, %c0_22] : memref<3x64x256xf32, #tpu.memory_space<vmem>>, vector<1x64x256xf32>
    %20 = vector.shape_cast %19 : vector<1x64x256xf32> to vector<64x256xf32>
    %cst_23 = arith.constant dense<0.000000e+00> : vector<34x256xf32>
    %21 = tpu.matmul %18, %20, %cst_23 {dimension_numbers = #tpu.dot_dimension_numbers<[1], [0], [0], [1], [0, 0, 1, 1], [], []>} : vector<34x64xf32>, vector<64x256xf32>, vector<34x256xf32> -> vector<34x256xf32>
    %22 = arith.addf %17, %21 : vector<34x256xf32>
    %23 = vector.extract_strided_slice %22 {offsets = [0, 128], sizes = [34, 128], strides = [1, 1]} : vector<34x256xf32> to vector<34x128xf32>
    %c0_24 = arith.constant 0 : index
    %c0_25 = arith.constant 0 : index
    %24 = vector.load %arg12[%c0_24, %c0_25] : memref<34x128xf32, #tpu.memory_space<vmem>>, vector<34x128xf32>
    tpu.vector_store %arg12[%c0_24, %c0_25], %23 {strides = array<i32>} : memref<34x128xf32, #tpu.memory_space<vmem>>, vector<34x128xf32>,
    %25 = vector.extract_strided_slice %22 {offsets = [0, 0], sizes = [34, 128], strides = [1, 1]} : vector<34x256xf32> to vector<34x128xf32>
    %c0_26 = arith.constant 0 : index
    %c0_27 = arith.constant 0 : index
    %26 = vector.load %arg3[%c0_26, %c0_27] : memref<1x128xf32, #tpu.memory_space<vmem>>, vector<1x128xf32>
    %27 = vector.shape_cast %26 : vector<1x128xf32> to vector<128xf32>
    %28 = vector.shape_cast %27 : vector<128xf32> to vector<1x128xf32>
    %29 = vector.broadcast %28 : vector<1x128xf32> to vector<34x128xf32>
    %30 = arith.addf %25, %29 : vector<34x128xf32>
    %cst_28 = arith.constant 0.000000e+00 : f32
    %31 = vector.broadcast %cst_28 : f32 to vector<34x128xf32>
    %32 = arith.maximumf %30, %31 : vector<34x128xf32>
    %33 = vector.extract_strided_slice %32 {offsets = [0, 0], sizes = [16, 128], strides = [1, 1]} : vector<34x128xf32> to vector<16x128xf32>
    %c1_29 = arith.constant 1 : index
    %c0_30 = arith.constant 0 : index
    %34 = vector.load %arg10[%c1_29, %c0_30] : memref<36x128xf32, #tpu.memory_space<vmem>>, vector<16x128xf32>
    tpu.vector_store %arg10[%c1_29, %c0_30], %33 {strides = array<i32>} : memref<36x128xf32, #tpu.memory_space<vmem>>, vector<16x128xf32>,
    %35 = vector.extract_strided_slice %32 {offsets = [18, 0], sizes = [16, 128], strides = [1, 1]} : vector<34x128xf32> to vector<16x128xf32>
    %c19_31 = arith.constant 19 : index
    %c0_32 = arith.constant 0 : index
    %36 = vector.load %arg10[%c19_31, %c0_32] : memref<36x128xf32, #tpu.memory_space<vmem>>, vector<16x128xf32>
    tpu.vector_store %arg10[%c19_31, %c0_32], %35 {strides = array<i32>} : memref<36x128xf32, #tpu.memory_space<vmem>>, vector<16x128xf32>,
    %c0_33 = arith.constant 0 : index
    %c0_34 = arith.constant 0 : index
    %37 = vector.load %arg10[%c0_33, %c0_34] : memref<36x128xf32, #tpu.memory_space<vmem>>, vector<34x128xf32>
    %c0_35 = arith.constant 0 : index
    %c0_36 = arith.constant 0 : index
    %c0_37 = arith.constant 0 : index
    %38 = vector.load %arg4[%c0_35, %c0_36, %c0_37] : memref<3x128x128xf32, #tpu.memory_space<vmem>>, vector<1x128x128xf32>
    %39 = vector.shape_cast %38 : vector<1x128x128xf32> to vector<128x128xf32>
    %cst_38 = arith.constant dense<0.000000e+00> : vector<34x128xf32>
    %40 = tpu.matmul %37, %39, %cst_38 {dimension_numbers = #tpu.dot_dimension_numbers<[1], [0], [0], [1], [0, 0, 1, 1], [], []>} : vector<34x128xf32>, vector<128x128xf32>, vector<34x128xf32> -> vector<34x128xf32>
    %c1_39 = arith.constant 1 : index
    %c0_40 = arith.constant 0 : index
    %41 = vector.load %arg10[%c1_39, %c0_40] : memref<36x128xf32, #tpu.memory_space<vmem>>, vector<34x128xf32>
    %c1_41 = arith.constant 1 : index
    %c0_42 = arith.constant 0 : index
    %c0_43 = arith.constant 0 : index
    %42 = vector.load %arg4[%c1_41, %c0_42, %c0_43] : memref<3x128x128xf32, #tpu.memory_space<vmem>>, vector<1x128x128xf32>
    %43 = vector.shape_cast %42 : vector<1x128x128xf32> to vector<128x128xf32>
    %cst_44 = arith.constant dense<0.000000e+00> : vector<34x128xf32>
    %44 = tpu.matmul %41, %43, %cst_44 {dimension_numbers = #tpu.dot_dimension_numbers<[1], [0], [0], [1], [0, 0, 1, 1], [], []>} : vector<34x128xf32>, vector<128x128xf32>, vector<34x128xf32> -> vector<34x128xf32>
    %45 = arith.addf %40, %44 : vector<34x128xf32>
    %c2_45 = arith.constant 2 : index
    %c0_46 = arith.constant 0 : index
    %46 = vector.load %arg10[%c2_45, %c0_46] : memref<36x128xf32, #tpu.memory_space<vmem>>, vector<34x128xf32>
    %c2_47 = arith.constant 2 : index
    %c0_48 = arith.constant 0 : index
    %c0_49 = arith.constant 0 : index
    %47 = vector.load %arg4[%c2_47, %c0_48, %c0_49] : memref<3x128x128xf32, #tpu.memory_space<vmem>>, vector<1x128x128xf32>
    %48 = vector.shape_cast %47 : vector<1x128x128xf32> to vector<128x128xf32>
    %cst_50 = arith.constant dense<0.000000e+00> : vector<34x128xf32>
    %49 = tpu.matmul %46, %48, %cst_50 {dimension_numbers = #tpu.dot_dimension_numbers<[1], [0], [0], [1], [0, 0, 1, 1], [], []>} : vector<34x128xf32>, vector<128x128xf32>, vector<34x128xf32> -> vector<34x128xf32>
    %50 = arith.addf %45, %49 : vector<34x128xf32>
    %c0_51 = arith.constant 0 : index
    %c0_52 = arith.constant 0 : index
    %51 = vector.load %arg5[%c0_51, %c0_52] : memref<1x128xf32, #tpu.memory_space<vmem>>, vector<1x128xf32>
    %52 = vector.shape_cast %51 : vector<1x128xf32> to vector<128xf32>
    %53 = vector.shape_cast %52 : vector<128xf32> to vector<1x128xf32>
    %54 = vector.broadcast %53 : vector<1x128xf32> to vector<34x128xf32>
    %55 = arith.addf %50, %54 : vector<34x128xf32>
    %cst_53 = arith.constant 0.000000e+00 : f32
    %56 = vector.broadcast %cst_53 : f32 to vector<34x128xf32>
    %57 = arith.maximumf %55, %56 : vector<34x128xf32>
    %58 = vector.extract_strided_slice %57 {offsets = [0, 0], sizes = [16, 128], strides = [1, 1]} : vector<34x128xf32> to vector<16x128xf32>
    %c1_54 = arith.constant 1 : index
    %c0_55 = arith.constant 0 : index
    %59 = vector.load %arg11[%c1_54, %c0_55] : memref<36x128xf32, #tpu.memory_space<vmem>>, vector<16x128xf32>
    tpu.vector_store %arg11[%c1_54, %c0_55], %58 {strides = array<i32>} : memref<36x128xf32, #tpu.memory_space<vmem>>, vector<16x128xf32>,
    %60 = vector.extract_strided_slice %57 {offsets = [18, 0], sizes = [16, 128], strides = [1, 1]} : vector<34x128xf32> to vector<16x128xf32>
    %c19_56 = arith.constant 19 : index
    %c0_57 = arith.constant 0 : index
    %61 = vector.load %arg11[%c19_56, %c0_57] : memref<36x128xf32, #tpu.memory_space<vmem>>, vector<16x128xf32>
    tpu.vector_store %arg11[%c19_56, %c0_57], %60 {strides = array<i32>} : memref<36x128xf32, #tpu.memory_space<vmem>>, vector<16x128xf32>,
    %c0_58 = arith.constant 0 : index
    %c0_59 = arith.constant 0 : index
    %62 = vector.load %arg11[%c0_58, %c0_59] : memref<36x128xf32, #tpu.memory_space<vmem>>, vector<34x128xf32>
    %c0_60 = arith.constant 0 : index
    %c0_61 = arith.constant 0 : index
    %c0_62 = arith.constant 0 : index
    %63 = vector.load %arg6[%c0_60, %c0_61, %c0_62] : memref<3x128x128xf32, #tpu.memory_space<vmem>>, vector<1x128x128xf32>
    %64 = vector.shape_cast %63 : vector<1x128x128xf32> to vector<128x128xf32>
    %cst_63 = arith.constant dense<0.000000e+00> : vector<34x128xf32>
    %65 = tpu.matmul %62, %64, %cst_63 {dimension_numbers = #tpu.dot_dimension_numbers<[1], [0], [0], [1], [0, 0, 1, 1], [], []>} : vector<34x128xf32>, vector<128x128xf32>, vector<34x128xf32> -> vector<34x128xf32>
    %c1_64 = arith.constant 1 : index
    %c0_65 = arith.constant 0 : index
    %66 = vector.load %arg11[%c1_64, %c0_65] : memref<36x128xf32, #tpu.memory_space<vmem>>, vector<34x128xf32>
    %c1_66 = arith.constant 1 : index
    %c0_67 = arith.constant 0 : index
    %c0_68 = arith.constant 0 : index
    %67 = vector.load %arg6[%c1_66, %c0_67, %c0_68] : memref<3x128x128xf32, #tpu.memory_space<vmem>>, vector<1x128x128xf32>
    %68 = vector.shape_cast %67 : vector<1x128x128xf32> to vector<128x128xf32>
    %cst_69 = arith.constant dense<0.000000e+00> : vector<34x128xf32>
    %69 = tpu.matmul %66, %68, %cst_69 {dimension_numbers = #tpu.dot_dimension_numbers<[1], [0], [0], [1], [0, 0, 1, 1], [], []>} : vector<34x128xf32>, vector<128x128xf32>, vector<34x128xf32> -> vector<34x128xf32>
    %70 = arith.addf %65, %69 : vector<34x128xf32>
    %c2_70 = arith.constant 2 : index
    %c0_71 = arith.constant 0 : index
    %71 = vector.load %arg11[%c2_70, %c0_71] : memref<36x128xf32, #tpu.memory_space<vmem>>, vector<34x128xf32>
    %c2_72 = arith.constant 2 : index
    %c0_73 = arith.constant 0 : index
    %c0_74 = arith.constant 0 : index
    %72 = vector.load %arg6[%c2_72, %c0_73, %c0_74] : memref<3x128x128xf32, #tpu.memory_space<vmem>>, vector<1x128x128xf32>
    %73 = vector.shape_cast %72 : vector<1x128x128xf32> to vector<128x128xf32>
    %cst_75 = arith.constant dense<0.000000e+00> : vector<34x128xf32>
    %74 = tpu.matmul %71, %73, %cst_75 {dimension_numbers = #tpu.dot_dimension_numbers<[1], [0], [0], [1], [0, 0, 1, 1], [], []>} : vector<34x128xf32>, vector<128x128xf32>, vector<34x128xf32> -> vector<34x128xf32>
    %75 = arith.addf %70, %74 : vector<34x128xf32>
    %c0_76 = arith.constant 0 : index
    %c0_77 = arith.constant 0 : index
    %76 = vector.load %arg7[%c0_76, %c0_77] : memref<1x128xf32, #tpu.memory_space<vmem>>, vector<1x128xf32>
    %77 = vector.shape_cast %76 : vector<1x128xf32> to vector<128xf32>
    %78 = vector.shape_cast %77 : vector<128xf32> to vector<1x128xf32>
    %79 = vector.broadcast %78 : vector<1x128xf32> to vector<34x128xf32>
    %80 = arith.addf %75, %79 : vector<34x128xf32>
    %81 = vector.extract_strided_slice %80 {offsets = [0, 0], sizes = [16, 128], strides = [1, 1]} : vector<34x128xf32> to vector<16x128xf32>
    %c0_78 = arith.constant 0 : index
    %c0_79 = arith.constant 0 : index
    %82 = vector.load %arg12[%c0_78, %c0_79] : memref<34x128xf32, #tpu.memory_space<vmem>>, vector<16x128xf32>
    %83 = arith.addf %81, %82 : vector<16x128xf32>
    %cst_80 = arith.constant 0.000000e+00 : f32
    %84 = vector.broadcast %cst_80 : f32 to vector<16x128xf32>
    %85 = arith.maximumf %83, %84 : vector<16x128xf32>
    %c0_81 = arith.constant 0 : index
    %c0_82 = arith.constant 0 : index
    %c0_83 = arith.constant 0 : index
    %86 = vector.load %arg8[%c0_81, %c0_82, %c0_83] : memref<2x16x128xf32, #tpu.memory_space<vmem>>, vector<1x16x128xf32>
    %87 = vector.shape_cast %86 : vector<1x16x128xf32> to vector<16x128xf32>
    %88 = vector.shape_cast %85 : vector<16x128xf32> to vector<1x16x128xf32>
    tpu.vector_store %arg8[%c0_81, %c0_82, %c0_83], %88 {strides = array<i32>} : memref<2x16x128xf32, #tpu.memory_space<vmem>>, vector<1x16x128xf32>,
    %89 = vector.extract_strided_slice %80 {offsets = [18, 0], sizes = [16, 128], strides = [1, 1]} : vector<34x128xf32> to vector<16x128xf32>
    %c18 = arith.constant 18 : index
    %c0_84 = arith.constant 0 : index
    %90 = vector.load %arg12[%c18, %c0_84] : memref<34x128xf32, #tpu.memory_space<vmem>>, vector<16x128xf32>
    %91 = arith.addf %89, %90 : vector<16x128xf32>
    %cst_85 = arith.constant 0.000000e+00 : f32
    %92 = vector.broadcast %cst_85 : f32 to vector<16x128xf32>
    %93 = arith.maximumf %91, %92 : vector<16x128xf32>
    %c1_86 = arith.constant 1 : index
    %c0_87 = arith.constant 0 : index
    %c0_88 = arith.constant 0 : index
    %94 = vector.load %arg8[%c1_86, %c0_87, %c0_88] : memref<2x16x128xf32, #tpu.memory_space<vmem>>, vector<1x16x128xf32>
    %95 = vector.shape_cast %94 : vector<1x16x128xf32> to vector<16x128xf32>
    %96 = vector.shape_cast %93 : vector<16x128xf32> to vector<1x16x128xf32>
    tpu.vector_store %arg8[%c1_86, %c0_87, %c0_88], %96 {strides = array<i32>} : memref<2x16x128xf32, #tpu.memory_space<vmem>>, vector<1x16x128xf32>,
    return
  }
  func.func @transform_0(%arg0: i32) -> (i32, i32, i32) {
    %c0_i32 = arith.constant 0 : i32
    %c0_i32_0 = arith.constant 0 : i32
    %c0_i32_1 = arith.constant 0 : i32
    return %arg0, %c0_i32, %c0_i32_0 : i32, i32, i32
  }
  func.func @transform_1(%arg0: i32) -> (i32, i32, i32) {
    %c0_i32 = arith.constant 0 : i32
    %c0_i32_0 = arith.constant 0 : i32
    %c0_i32_1 = arith.constant 0 : i32
    %c0_i32_2 = arith.constant 0 : i32
    return %c0_i32, %c0_i32_0, %c0_i32_1 : i32, i32, i32
  }
  func.func @transform_2(%arg0: i32) -> (i32, i32) {
    %c0_i32 = arith.constant 0 : i32
    %c0_i32_0 = arith.constant 0 : i32
    %c0_i32_1 = arith.constant 0 : i32
    return %c0_i32, %c0_i32_0 : i32, i32
  }
  func.func @transform_3(%arg0: i32) -> (i32, i32, i32) {
    %c0_i32 = arith.constant 0 : i32
    %c0_i32_0 = arith.constant 0 : i32
    %c0_i32_1 = arith.constant 0 : i32
    %c0_i32_2 = arith.constant 0 : i32
    return %c0_i32, %c0_i32_0, %c0_i32_1 : i32, i32, i32
  }
  func.func @transform_4(%arg0: i32) -> (i32, i32) {
    %c0_i32 = arith.constant 0 : i32
    %c0_i32_0 = arith.constant 0 : i32
    %c0_i32_1 = arith.constant 0 : i32
    return %c0_i32, %c0_i32_0 : i32, i32
  }
  func.func @transform_5(%arg0: i32) -> (i32, i32, i32) {
    %c0_i32 = arith.constant 0 : i32
    %c0_i32_0 = arith.constant 0 : i32
    %c0_i32_1 = arith.constant 0 : i32
    %c0_i32_2 = arith.constant 0 : i32
    return %c0_i32, %c0_i32_0, %c0_i32_1 : i32, i32, i32
  }
  func.func @transform_6(%arg0: i32) -> (i32, i32) {
    %c0_i32 = arith.constant 0 : i32
    %c0_i32_0 = arith.constant 0 : i32
    %c0_i32_1 = arith.constant 0 : i32
    return %c0_i32, %c0_i32_0 : i32, i32
  }
  func.func @transform_7(%arg0: i32) -> (i32, i32, i32) {
    %c0_i32 = arith.constant 0 : i32
    %c0_i32_0 = arith.constant 0 : i32
    %c0_i32_1 = arith.constant 0 : i32
    return %arg0, %c0_i32, %c0_i32_0 : i32, i32, i32
  }
}

</mosaic_0001>

<llo_original>
// kernel: tpu_custom_call.1
$region0: #{tpu_custom_call.1}
  #allocation0 [shape = 'u32[]', space=smem, size = 0x4, offset = 0x4, fixed_abs, tag = 'smem constant byte address 0x4 - core index']
  #allocation1 [shape = 'u32[144,128]{1,0:T(1,128)}', space=vmem, size = 0x12000, scoped, tag = 'internal scratch']
  #allocation2 [shape = 'f32[36,64]{1,0:T(8,128)}', space=vmem, size = 0x5000, scoped, tag = 'scratch operand']
  #allocation3 [shape = 'f32[36,128]{1,0:T(8,128)}', space=vmem, size = 0x5000, scoped, tag = 'scratch operand']
  #allocation4 [shape = 'f32[36,128]{1,0:T(8,128)}', space=vmem, size = 0x5000, scoped, tag = 'scratch operand']
  #allocation5 [shape = 'f32[34,128]{1,0:T(8,128)}', space=vmem, size = 0x5000, scoped, tag = 'scratch operand']
  %s0 = inlined_call_operand.hbm [shape: f32[2,16,64], index: 0, kind: input, shape index: {}]
  %s1 = inlined_call_operand.hbm [shape: f32[3,64,256], index: 1, kind: input, shape index: {}]
  %s2 = inlined_call_operand.vmem [shape: f32[1,128], index: 2, kind: input, shape index: {}]
  %s3 = inlined_call_operand.hbm [shape: f32[3,128,128], index: 3, kind: input, shape index: {}]
  %s4 = inlined_call_operand.vmem [shape: f32[1,128], index: 4, kind: input, shape index: {}]
  %s5 = inlined_call_operand.hbm [shape: f32[3,128,128], index: 5, kind: input, shape index: {}]
  %s6 = inlined_call_operand.vmem [shape: f32[1,128], index: 6, kind: input, shape index: {}]
  %s7 = inlined_call_operand.hbm [shape: f32[2,16,128], index: 7, kind: output, shape index: {}]
  %s8 = sld [smem:[#allocation0]]
  $region58: #{tpu_custom_call.1} parent=0
    _
  %s10 = ssub.s32 1, %s8
  %s11 = scalar_select 0, %s10, %s8
  $region1: #{tpu_custom_call.1} parent=0
    #allocation6 [shape = 'u8[16384]{0}', space=vmem, size = 0x4000, scoped, tag = 'input window, operand 0, single buffered']
    #allocation7 [shape = 's32[1]{0}', space=sflag, size = 0x4, scoped, tag = 'scoped memory for tpu_custom_call.1']
    #allocation8 [shape = 's32[1]{0}', space=sflag, size = 0x4, scoped, tag = 'scoped memory for tpu_custom_call.1']
    #allocation9 [shape = 'u8[196608]{0}', space=vmem, size = 0x30000, scoped, tag = 'input window, operand 1, single buffered']
    #allocation10 [shape = 's32[1]{0}', space=sflag, size = 0x4, scoped, tag = 'scoped memory for tpu_custom_call.1']
    #allocation11 [shape = 'u8[196608]{0}', space=vmem, size = 0x30000, scoped, tag = 'input window, operand 3, single buffered']
    #allocation12 [shape = 'u8[196608]{0}', space=vmem, size = 0x30000, scoped, tag = 'input window, operand 5, single buffered']
    #allocation13 [shape = 's32[1]{0}', space=sflag, size = 0x4, scoped, tag = 'scoped memory for tpu_custom_call.1']
    #allocation14 [shape = 'u8[16384]{0}', space=vmem, size = 0x4000, scoped, tag = 'output window, operand 0, single buffered']
    %12 = vsyncpa [#allocation7], 0
    %13 = vsyncpa [#allocation10], 0
    %14 = vsyncpa [#allocation13], 0
    %15 = vsyncpa [#allocation8], 0
    // Predicated region
    $region2: #{tpu_custom_call.1} parent=1 // pred_check
      _
    $region3: #{tpu_custom_call.1} parent=1 // pred_check_branch
      %17 = sbr.rel (0) target = $region5
    $region4: #{tpu_custom_call.1} parent=1 // pred_region
      %s19 = ssub.s32 512, 512
      %20 = vsyncadd [#allocation7], %s19
      %s21 = sshll.u32 [#allocation6], 4
      %s22 = int_to_ptr.vmem [resolvable:$true] %s21
      %27 = dma.hbm_to_vmem [thread:$0]  %s0, 512, %s22, [#allocation7], 128, 128, 8
    $region5: #{tpu_custom_call.1} parent=1 // pred_fallthru
      _
    // Predicated region
    $region6: #{tpu_custom_call.1} parent=1 // pred_check
      _
    $region7: #{tpu_custom_call.1} parent=1 // pred_check_branch
      %29 = sbr.rel (0) target = $region9
    $region8: #{tpu_custom_call.1} parent=1 // pred_region
      %s31 = ssub.s32 6144, 6144
      %32 = vsyncadd [#allocation10], %s31
      %s33 = sshll.u32 [#allocation9], 4
      %s34 = int_to_ptr.vmem [resolvable:$true] %s33
      %39 = dma.hbm_to_vmem [thread:$0]  %s1, 6144, %s34, [#allocation10], 256, 256, 16
    $region9: #{tpu_custom_call.1} parent=1 // pred_fallthru
      _
    // Predicated region
    $region10: #{tpu_custom_call.1} parent=1 // pred_check
      _
    $region11: #{tpu_custom_call.1} parent=1 // pred_check_branch
      %41 = sbr.rel (0) target = $region13
    $region12: #{tpu_custom_call.1} parent=1 // pred_region
      _
    $region13: #{tpu_custom_call.1} parent=1 // pred_fallthru
      _
    // Predicated region
    $region14: #{tpu_custom_call.1} parent=1 // pred_check
      _
    $region15: #{tpu_custom_call.1} parent=1 // pred_check_branch
      %43 = sbr.rel (0) target = $region17
    $region16: #{tpu_custom_call.1} parent=1 // pred_region
      %s45 = ssub.s32 6144, 6144
      %46 = vsyncadd [#allocation10], %s45
      %s47 = sshll.u32 [#allocation11], 4
      %s48 = int_to_ptr.vmem [resolvable:$true] %s47
      %53 = dma.hbm_to_vmem [thread:$0]  %s3, 6144, %s48, [#allocation10], 128, 128, 8
    $region17: #{tpu_custom_call.1} parent=1 // pred_fallthru
      _
    // Predicated region
    $region18: #{tpu_custom_call.1} parent=1 // pred_check
      _
    $region19: #{tpu_custom_call.1} parent=1 // pred_check_branch
      %55 = sbr.rel (0) target = $region21
    $region20: #{tpu_custom_call.1} parent=1 // pred_region
      _
    $region21: #{tpu_custom_call.1} parent=1 // pred_fallthru
      _
    // Predicated region
    $region22: #{tpu_custom_call.1} parent=1 // pred_check
      _
    $region23: #{tpu_custom_call.1} parent=1 // pred_check_branch
      %57 = sbr.rel (0) target = $region25
    $region24: #{tpu_custom_call.1} parent=1 // pred_region
      %s59 = ssub.s32 6144, 6144
      %60 = vsyncadd [#allocation13], %s59
      %s61 = sshll.u32 [#allocation12], 4
      %s62 = int_to_ptr.vmem [resolvable:$true] %s61
      %67 = dma.hbm_to_vmem [thread:$0]  %s5, 6144, %s62, [#allocation13], 128, 128, 8
    $region25: #{tpu_custom_call.1} parent=1 // pred_fallthru
      _
    // Predicated region
    $region26: #{tpu_custom_call.1} parent=1 // pred_check
      _
    $region27: #{tpu_custom_call.1} parent=1 // pred_check_branch
      %69 = sbr.rel (0) target = $region29
    $region28: #{tpu_custom_call.1} parent=1 // pred_region
      _
    $region29: #{tpu_custom_call.1} parent=1 // pred_fallthru
      _
    // Predicated region
    $region30: #{tpu_custom_call.1} parent=1 // pred_check
      _
    $region31: #{tpu_custom_call.1} parent=1 // pred_check_branch
      %71 = sbr.rel (0) target = $region33
    $region32: #{tpu_custom_call.1} parent=1 // pred_region
      %72 = dma.done [#allocation7], 512
    $region33: #{tpu_custom_call.1} parent=1 // pred_fallthru
      _
    // Predicated region
    $region34: #{tpu_custom_call.1} parent=1 // pred_check
      _
    $region35: #{tpu_custom_call.1} parent=1 // pred_check_branch
      %74 = sbr.rel (0) target = $region37
    $region36: #{tpu_custom_call.1} parent=1 // pred_region
      %75 = dma.done [#allocation10], 6144
    $region37: #{tpu_custom_call.1} parent=1 // pred_fallthru
      _
    // Predicated region
    $region38: #{tpu_custom_call.1} parent=1 // pred_check
      _
    $region39: #{tpu_custom_call.1} parent=1 // pred_check_branch
      %77 = sbr.rel (0) target = $region41
    $region40: #{tpu_custom_call.1} parent=1 // pred_region
      %78 = dma.done [#allocation10], 6144
    $region41: #{tpu_custom_call.1} parent=1 // pred_fallthru
      _
    // Predicated region
    $region42: #{tpu_custom_call.1} parent=1 // pred_check
      _
    $region43: #{tpu_custom_call.1} parent=1 // pred_check_branch
      %80 = sbr.rel (0) target = $region45
    $region44: #{tpu_custom_call.1} parent=1 // pred_region
      %81 = dma.done [#allocation13], 6144
    $region45: #{tpu_custom_call.1} parent=1 // pred_fallthru
      _
    %p82 = scmp.eq.s32.totalorder 0, 0
    // Predicated region
    $region46: #{tpu_custom_call.1} parent=1 // pred_check
      %p83 = pneg %p82
    $region47: #{tpu_custom_call.1} parent=1 // pred_check_branch
      %85 = sbr.rel (%p83) target = $region49
    $region48: #{tpu_custom_call.1} parent=1 // pred_region
      %vm86 = vcmask 523264
      %87 = vst.msk [vmem:[#allocation2] sm:$0xff] %vm86, 0.0
      %88 = vst.msk [vmem:[#allocation2 + $0x8] sm:$0xff] %vm86, 0.0
      %89 = vst.msk [vmem:[#allocation2 + $0x10] sm:$0xff] %vm86, 0.0
      %90 = vst.msk [vmem:[#allocation2 + $0x18] sm:$0xff] %vm86, 0.0
      %vm91 = vcmask 519168
      %92 = vst.msk [vmem:[#allocation2 + $0x20] sm:$0xf] %vm91, 0.0
      %93 = vst [vmem:[#allocation3] sm:$0xff] 0.0
      %94 = vst [vmem:[#allocation3 + $0x8] sm:$0xff] 0.0
      %95 = vst [vmem:[#allocation3 + $0x10] sm:$0xff] 0.0
      %96 = vst [vmem:[#allocation3 + $0x18] sm:$0xff] 0.0
      %97 = vst [vmem:[#allocation3 + $0x20] sm:$0xf] 0.0
      %98 = vst [vmem:[#allocation4] sm:$0xff] 0.0
      %99 = vst [vmem:[#allocation4 + $0x8] sm:$0xff] 0.0
      %100 = vst [vmem:[#allocation4 + $0x10] sm:$0xff] 0.0
      %101 = vst [vmem:[#allocation4 + $0x18] sm:$0xff] 0.0
      %102 = vst [vmem:[#allocation4 + $0x20] sm:$0xf] 0.0
    $region49: #{tpu_custom_call.1} parent=1 // pred_fallthru
      _
    %v103 = vld [vmem:[#allocation6] sm:$0xff]
    %v104 = vld [vmem:[#allocation6 + $0x8] sm:$0xff]
    %vm105 = vcmask 523264
    %106 = vst.msk [vmem:[#allocation2 + $0x1] sm:$0xff] %vm105, %v103
    %107 = vst.msk [vmem:[#allocation2 + $0x9] sm:$0xff] %vm105, %v104
    %s108 = scalar_lea.vmem [#allocation6], 16
    %v109 = vld [vmem:[%s108] sm:$0xff]
    %v110 = vld [vmem:[%s108 + $0x8] sm:$0xff]
    %111 = vst.msk [vmem:[#allocation2 + $0x13] sm:$0xff] %vm105, %v109
    %112 = vst.msk [vmem:[#allocation2 + $0x1b] sm:$0xff] %vm105, %v110
    %v113 = vld [vmem:[#allocation2] sm:$0xff]
    %v114 = vld [vmem:[#allocation2 + $0x8] sm:$0xff]
    %v115 = vld [vmem:[#allocation2 + $0x10] sm:$0xff]
    %v116 = vld [vmem:[#allocation2 + $0x18] sm:$0xff]
    %v117 = vld [vmem:[#allocation2 + $0x20] sm:$0x3]
    %v118 = vld [vmem:[#allocation9] sm:$0xff]
    %v119 = vld [vmem:[#allocation9 + $0x8] sm:$0xff]
    %v120 = vld [vmem:[#allocation9 + $0x10] sm:$0xff]
    %v121 = vld [vmem:[#allocation9 + $0x18] sm:$0xff]
    %v122 = vld [vmem:[#allocation9 + $0x20] sm:$0xff]
    %v123 = vld [vmem:[#allocation9 + $0x28] sm:$0xff]
    %v124 = vld [vmem:[#allocation9 + $0x30] sm:$0xff]
    %v125 = vld [vmem:[#allocation9 + $0x38] sm:$0xff]
    %v126 = vld [vmem:[#allocation9 + $0x40] sm:$0xff]
    %v127 = vld [vmem:[#allocation9 + $0x48] sm:$0xff]
    %v128 = vld [vmem:[#allocation9 + $0x50] sm:$0xff]
    %v129 = vld [vmem:[#allocation9 + $0x58] sm:$0xff]
    %v130 = vld [vmem:[#allocation9 + $0x60] sm:$0xff]
    %v131 = vld [vmem:[#allocation9 + $0x68] sm:$0xff]
    %v132 = vld [vmem:[#allocation9 + $0x70] sm:$0xff]
    %v133 = vld [vmem:[#allocation9 + $0x78] sm:$0xff]
    %v134 = vld [vmem:[#allocation2 + $0x1] sm:$0xff]
    %v135 = vld [vmem:[#allocation2 + $0x9] sm:$0xff]
    %v136 = vld [vmem:[#allocation2 + $0x11] sm:$0xff]
    %v137 = vld [vmem:[#allocation2 + $0x19] sm:$0xff]
    %v138 = vld [vmem:[#allocation2 + $0x21] sm:$0x3]
    %s139 = scalar_lea.vmem [#allocation9], 128
    %v140 = vld [vmem:[%s139] sm:$0xff]
    %v141 = vld [vmem:[%s139 + $0x8] sm:$0xff]
    %v142 = vld [vmem:[%s139 + $0x10] sm:$0xff]
    %v143 = vld [vmem:[%s139 + $0x18] sm:$0xff]
    %v144 = vld [vmem:[%s139 + $0x20] sm:$0xff]
    %v145 = vld [vmem:[%s139 + $0x28] sm:$0xff]
    %v146 = vld [vmem:[%s139 + $0x30] sm:$0xff]
    %v147 = vld [vmem:[%s139 + $0x38] sm:$0xff]
    %v148 = vld [vmem:[%s139 + $0x40] sm:$0xff]
    %v149 = vld [vmem:[%s139 + $0x48] sm:$0xff]
    %v150 = vld [vmem:[%s139 + $0x50] sm:$0xff]
    %v151 = vld [vmem:[%s139 + $0x58] sm:$0xff]
    %v152 = vld [vmem:[%s139 + $0x60] sm:$0xff]
    %v153 = vld [vmem:[%s139 + $0x68] sm:$0xff]
    %v154 = vld [vmem:[%s139 + $0x70] sm:$0xff]
    %v155 = vld [vmem:[%s139 + $0x78] sm:$0xff]
    %v157 = vsel %vm105, %v134, 0
    %v160 = vsel %vm105, %v135, 0
    %v163 = vsel %vm105, %v136, 0
    %v166 = vsel %vm105, %v137, 0
    %v169 = vsel %vm105, %v138, 0
    %171 = vmatprep.subr.mxu0 %v141
    %172 = vmatpush1.msra.mxu0 %v140
    %173 = vmatprep.subr.mxu0 %v143
    %174 = vmatpush1.msra.mxu0 %v142
    %175 = vmatprep.subr.mxu0 %v145
    %176 = vmatpush1.msra.mxu0 %v144
    %177 = vmatprep.subr.mxu0 %v147
    %178 = vmatpush1.msra.mxu0 %v146
    %179 = vmatprep.subr.mxu0 %v149
    %180 = vmatpush1.msra.mxu0 %v148
    %181 = vmatprep.subr.mxu0 %v151
    %182 = vmatpush1.msra.mxu0 %v150
    %183 = vmatprep.subr.mxu0 %v153
    %184 = vmatpush1.msra.mxu0 %v152
    %185 = vmatprep.subr.mxu0 %v155
    %186 = vmatpush1.msra.mxu0 %v154
    %187 = vmatprep.subr.mxu0 0.0
    %188 = vmatpush1.msra.mxu0 0.0
    %189 = vmatprep.subr.mxu0 0.0
    %190 = vmatpush1.msra.mxu0 0.0
    %191 = vmatprep.subr.mxu0 0.0
    %192 = vmatpush1.msra.mxu0 0.0
    %193 = vmatprep.subr.mxu0 0.0
    %194 = vmatpush1.msra.mxu0 0.0
    %195 = vmatprep.subr.mxu0 0.0
    %196 = vmatpush1.msra.mxu0 0.0
    %197 = vmatprep.subr.mxu0 0.0
    %198 = vmatpush1.msra.mxu0 0.0
    %199 = vmatprep.subr.mxu0 0.0
    %200 = vmatpush1.msra.mxu0 0.0
    %201 = vmatprep.subr.mxu0 0.0
    %202 = vmatpush1.msra.mxu0 0.0
    %203 = vmatprep.subr.mxu0 0.0
    %204 = vmatpush1.msra.mxu0 0.0
    %205 = vmatprep.subr.mxu0 0.0
    %206 = vmatpush1.msra.mxu0 0.0
    %207 = vmatprep.subr.mxu0 0.0
    %208 = vmatpush1.msra.mxu0 0.0
    %209 = vmatprep.subr.mxu0 0.0
    %210 = vmatpush1.msra.mxu0 0.0
    %211 = vmatprep.subr.mxu0 0.0
    %212 = vmatpush1.msra.mxu0 0.0
    %213 = vmatprep.subr.mxu0 0.0
    %214 = vmatpush1.msra.mxu0 0.0
    %215 = vmatprep.subr.mxu0 0.0
    %216 = vmatpush1.msra.mxu0 0.0
    %217 = vmatprep.subr.mxu0 0.0
    %218 = vmatpush1.msra.mxu0 0.0
    %219 = vmatprep.subr.mxu0 0.0
    %220 = vmatpush1.msra.mxu0 0.0
    %221 = vmatprep.subr.mxu0 0.0
    %222 = vmatpush1.msra.mxu0 0.0
    %223 = vmatprep.subr.mxu0 0.0
    %224 = vmatpush1.msra.mxu0 0.0
    %225 = vmatprep.subr.mxu0 0.0
    %226 = vmatpush1.msra.mxu0 0.0
    %227 = vmatprep.subr.mxu0 0.0
    %228 = vmatpush1.msra.mxu0 0.0
    %229 = vmatprep.subr.mxu0 0.0
    %230 = vmatpush1.msra.mxu0 0.0
    %231 = vmatprep.subr.mxu0 0.0
    %232 = vmatpush1.msra.mxu0 0.0
    %233 = vmatprep.subr.mxu0 0.0
    %234 = vmatpush1.msra.mxu0 0.0
    %235 = vmatprep.mubr.f32.mxu0 0.0
    %236 = vmatmul.mubr.f32.gmra.mrb[0].mxu0 %v157
    %v237 = vpop.f32.mrb[0].mxu0
    %v238 = vadd.f32 0.0, %v237
    %v239 = vpop.f32.mrb[0].mxu0
    %v240 = vadd.f32 0.0, %v239
    %241 = vmatprep.mubr.f32.mxu0 0.0
    %242 = vmatmul.mubr.f32.gmra.mrb[0].mxu0 %v160
    %v243 = vpop.f32.mrb[0].mxu0
    %v244 = vadd.f32 0.0, %v243
    %v245 = vpop.f32.mrb[0].mxu0
    %v246 = vadd.f32 0.0, %v245
    %247 = vmatprep.mubr.f32.mxu0 0.0
    %248 = vmatmul.mubr.f32.gmra.mrb[0].mxu0 %v163
    %v249 = vpop.f32.mrb[0].mxu0
    %v250 = vadd.f32 0.0, %v249
    %v251 = vpop.f32.mrb[0].mxu0
    %v252 = vadd.f32 0.0, %v251
    %253 = vmatprep.mubr.f32.mxu0 0.0
    %254 = vmatmul.mubr.f32.gmra.mrb[0].mxu0 %v166
    %v255 = vpop.f32.mrb[0].mxu0
    %v256 = vadd.f32 0.0, %v255
    %v257 = vpop.f32.mrb[0].mxu0
    %v258 = vadd.f32 0.0, %v257
    %259 = vmatprep.mubr.f32.mxu0 0.0
    %260 = vmatmul.mubr.f32.gmra.mrb[0].mxu0 %v169
    %v261 = vpop.f32.mrb[0].mxu0
    %v262 = vadd.f32 0.0, %v261
    %v263 = vpop.f32.mrb[0].mxu0
    %v264 = vadd.f32 0.0, %v263
    %265 = vdwg.mxu0
    %v267 = vsel %vm105, %v113, 0
    %v270 = vsel %vm105, %v114, 0
    %v273 = vsel %vm105, %v115, 0
    %v276 = vsel %vm105, %v116, 0
    %v279 = vsel %vm105, %v117, 0
    %281 = vmatprep.subr.mxu0 %v119
    %282 = vmatpush1.msra.mxu0 %v118
    %283 = vmatprep.subr.mxu0 %v121
    %284 = vmatpush1.msra.mxu0 %v120
    %285 = vmatprep.subr.mxu0 %v123
    %286 = vmatpush1.msra.mxu0 %v122
    %287 = vmatprep.subr.mxu0 %v125
    %288 = vmatpush1.msra.mxu0 %v124
    %289 = vmatprep.subr.mxu0 %v127
    %290 = vmatpush1.msra.mxu0 %v126
    %291 = vmatprep.subr.mxu0 %v129
    %292 = vmatpush1.msra.mxu0 %v128
    %293 = vmatprep.subr.mxu0 %v131
    %294 = vmatpush1.msra.mxu0 %v130
    %295 = vmatprep.subr.mxu0 %v133
    %296 = vmatpush1.msra.mxu0 %v132
    %297 = vmatprep.subr.mxu0 0.0
    %298 = vmatpush1.msra.mxu0 0.0
    %299 = vmatprep.subr.mxu0 0.0
    %300 = vmatpush1.msra.mxu0 0.0
    %301 = vmatprep.subr.mxu0 0.0
    %302 = vmatpush1.msra.mxu0 0.0
    %303 = vmatprep.subr.mxu0 0.0
    %304 = vmatpush1.msra.mxu0 0.0
    %305 = vmatprep.subr.mxu0 0.0
    %306 = vmatpush1.msra.mxu0 0.0
    %307 = vmatprep.subr.mxu0 0.0
    %308 = vmatpush1.msra.mxu0 0.0
    %309 = vmatprep.subr.mxu0 0.0
    %310 = vmatpush1.msra.mxu0 0.0
    %311 = vmatprep.subr.mxu0 0.0
    %312 = vmatpush1.msra.mxu0 0.0
    %313 = vmatprep.subr.mxu0 0.0
    %314 = vmatpush1.msra.mxu0 0.0
    %315 = vmatprep.subr.mxu0 0.0
    %316 = vmatpush1.msra.mxu0 0.0
    %317 = vmatprep.subr.mxu0 0.0
    %318 = vmatpush1.msra.mxu0 0.0
    %319 = vmatprep.subr.mxu0 0.0
    %320 = vmatpush1.msra.mxu0 0.0
    %321 = vmatprep.subr.mxu0 0.0
    %322 = vmatpush1.msra.mxu0 0.0
    %323 = vmatprep.subr.mxu0 0.0
    %324 = vmatpush1.msra.mxu0 0.0
    %325 = vmatprep.subr.mxu0 0.0
    %326 = vmatpush1.msra.mxu0 0.0
    %327 = vmatprep.subr.mxu0 0.0
    %328 = vmatpush1.msra.mxu0 0.0
    %329 = vmatprep.subr.mxu0 0.0
    %330 = vmatpush1.msra.mxu0 0.0
    %331 = vmatprep.subr.mxu0 0.0
    %332 = vmatpush1.msra.mxu0 0.0
    %333 = vmatprep.subr.mxu0 0.0
    %334 = vmatpush1.msra.mxu0 0.0
    %335 = vmatprep.subr.mxu0 0.0
    %336 = vmatpush1.msra.mxu0 0.0
    %337 = vmatprep.subr.mxu0 0.0
    %338 = vmatpush1.msra.mxu0 0.0
    %339 = vmatprep.subr.mxu0 0.0
    %340 = vmatpush1.msra.mxu0 0.0
    %341 = vmatprep.subr.mxu0 0.0
    %342 = vmatpush1.msra.mxu0 0.0
    %343 = vmatprep.subr.mxu0 0.0
    %344 = vmatpush1.msra.mxu0 0.0
    %345 = vmatprep.mubr.f32.mxu0 0.0
    %346 = vmatmul.mubr.f32.gmra.mrb[0].mxu0 %v267
    %v347 = vpop.f32.mrb[0].mxu0
    %v348 = vadd.f32 %v238, %v347
    %v349 = vpop.f32.mrb[0].mxu0
    %v350 = vadd.f32 %v240, %v349
    %351 = vmatprep.mubr.f32.mxu0 0.0
    %352 = vmatmul.mubr.f32.gmra.mrb[0].mxu0 %v270
    %v353 = vpop.f32.mrb[0].mxu0
    %v354 = vadd.f32 %v244, %v353
    %v355 = vpop.f32.mrb[0].mxu0
    %v356 = vadd.f32 %v246, %v355
    %357 = vmatprep.mubr.f32.mxu0 0.0
    %358 = vmatmul.mubr.f32.gmra.mrb[0].mxu0 %v273
    %v359 = vpop.f32.mrb[0].mxu0
    %v360 = vadd.f32 %v250, %v359
    %v361 = vpop.f32.mrb[0].mxu0
    %v362 = vadd.f32 %v252, %v361
    %363 = vmatprep.mubr.f32.mxu0 0.0
    %364 = vmatmul.mubr.f32.gmra.mrb[0].mxu0 %v276
    %v365 = vpop.f32.mrb[0].mxu0
    %v366 = vadd.f32 %v256, %v365
    %v367 = vpop.f32.mrb[0].mxu0
    %v368 = vadd.f32 %v258, %v367
    %369 = vmatprep.mubr.f32.mxu0 0.0
    %370 = vmatmul.mubr.f32.gmra.mrb[0].mxu0 %v279
    %v371 = vpop.f32.mrb[0].mxu0
    %v372 = vadd.f32 %v262, %v371
    %v373 = vpop.f32.mrb[0].mxu0
    %v374 = vadd.f32 %v264, %v373
    %375 = vdwg.mxu0
    %v376 = vld [vmem:[#allocation2 + $0x2] sm:$0xff]
    %v377 = vld [vmem:[#allocation2 + $0xa] sm:$0xff]
    %v378 = vld [vmem:[#allocation2 + $0x12] sm:$0xff]
    %v379 = vld [vmem:[#allocation2 + $0x1a] sm:$0xff]
    %v380 = vld [vmem:[#allocation2 + $0x22] sm:$0x3]
    %s381 = scalar_lea.vmem [#allocation9], 256
    %v382 = vld [vmem:[%s381] sm:$0xff]
    %v383 = vld [vmem:[%s381 + $0x8] sm:$0xff]
    %v384 = vld [vmem:[%s381 + $0x10] sm:$0xff]
    %v385 = vld [vmem:[%s381 + $0x18] sm:$0xff]
    %v386 = vld [vmem:[%s381 + $0x20] sm:$0xff]
    %v387 = vld [vmem:[%s381 + $0x28] sm:$0xff]
    %v388 = vld [vmem:[%s381 + $0x30] sm:$0xff]
    %v389 = vld [vmem:[%s381 + $0x38] sm:$0xff]
    %v390 = vld [vmem:[%s381 + $0x40] sm:$0xff]
    %v391 = vld [vmem:[%s381 + $0x48] sm:$0xff]
    %v392 = vld [vmem:[%s381 + $0x50] sm:$0xff]
    %v393 = vld [vmem:[%s381 + $0x58] sm:$0xff]
    %v394 = vld [vmem:[%s381 + $0x60] sm:$0xff]
    %v395 = vld [vmem:[%s381 + $0x68] sm:$0xff]
    %v396 = vld [vmem:[%s381 + $0x70] sm:$0xff]
    %v397 = vld [vmem:[%s381 + $0x78] sm:$0xff]
    %v399 = vsel %vm105, %v376, 0
    %v402 = vsel %vm105, %v377, 0
    %v405 = vsel %vm105, %v378, 0
    %v408 = vsel %vm105, %v379, 0
    %v411 = vsel %vm105, %v380, 0
    %413 = vmatprep.subr.mxu0 %v383
    %414 = vmatpush1.msra.mxu0 %v382
    %415 = vmatprep.subr.mxu0 %v385
    %416 = vmatpush1.msra.mxu0 %v384
    %417 = vmatprep.subr.mxu0 %v387
    %418 = vmatpush1.msra.mxu0 %v386
    %419 = vmatprep.subr.mxu0 %v389
    %420 = vmatpush1.msra.mxu0 %v388
    %421 = vmatprep.subr.mxu0 %v391
    %422 = vmatpush1.msra.mxu0 %v390
    %423 = vmatprep.subr.mxu0 %v393
    %424 = vmatpush1.msra.mxu0 %v392
    %425 = vmatprep.subr.mxu0 %v395
    %426 = vmatpush1.msra.mxu0 %v394
    %427 = vmatprep.subr.mxu0 %v397
    %428 = vmatpush1.msra.mxu0 %v396
    %429 = vmatprep.subr.mxu0 0.0
    %430 = vmatpush1.msra.mxu0 0.0
    %431 = vmatprep.subr.mxu0 0.0
    %432 = vmatpush1.msra.mxu0 0.0
    %433 = vmatprep.subr.mxu0 0.0
    %434 = vmatpush1.msra.mxu0 0.0
    %435 = vmatprep.subr.mxu0 0.0
    %436 = vmatpush1.msra.mxu0 0.0
    %437 = vmatprep.subr.mxu0 0.0
    %438 = vmatpush1.msra.mxu0 0.0
    %439 = vmatprep.subr.mxu0 0.0
    %440 = vmatpush1.msra.mxu0 0.0
    %441 = vmatprep.subr.mxu0 0.0
    %442 = vmatpush1.msra.mxu0 0.0
    %443 = vmatprep.subr.mxu0 0.0
    %444 = vmatpush1.msra.mxu0 0.0
    %445 = vmatprep.subr.mxu0 0.0
    %446 = vmatpush1.msra.mxu0 0.0
    %447 = vmatprep.subr.mxu0 0.0
    %448 = vmatpush1.msra.mxu0 0.0
    %449 = vmatprep.subr.mxu0 0.0
    %450 = vmatpush1.msra.mxu0 0.0
    %451 = vmatprep.subr.mxu0 0.0
    %452 = vmatpush1.msra.mxu0 0.0
    %453 = vmatprep.subr.mxu0 0.0
    %454 = vmatpush1.msra.mxu0 0.0
    %455 = vmatprep.subr.mxu0 0.0
    %456 = vmatpush1.msra.mxu0 0.0
    %457 = vmatprep.subr.mxu0 0.0
    %458 = vmatpush1.msra.mxu0 0.0
    %459 = vmatprep.subr.mxu0 0.0
    %460 = vmatpush1.msra.mxu0 0.0
    %461 = vmatprep.subr.mxu0 0.0
    %462 = vmatpush1.msra.mxu0 0.0
    %463 = vmatprep.subr.mxu0 0.0
    %464 = vmatpush1.msra.mxu0 0.0
    %465 = vmatprep.subr.mxu0 0.0
    %466 = vmatpush1.msra.mxu0 0.0
    %467 = vmatprep.subr.mxu0 0.0
    %468 = vmatpush1.msra.mxu0 0.0
    %469 = vmatprep.subr.mxu0 0.0
    %470 = vmatpush1.msra.mxu0 0.0
    %471 = vmatprep.subr.mxu0 0.0
    %472 = vmatpush1.msra.mxu0 0.0
    %473 = vmatprep.subr.mxu0 0.0
    %474 = vmatpush1.msra.mxu0 0.0
    %475 = vmatprep.subr.mxu0 0.0
    %476 = vmatpush1.msra.mxu0 0.0
    %477 = vmatprep.mubr.f32.mxu0 0.0
    %478 = vmatmul.mubr.f32.gmra.mrb[0].mxu0 %v399
    %v479 = vpop.f32.mrb[0].mxu0
    %v480 = vadd.f32 0.0, %v479
    %v481 = vpop.f32.mrb[0].mxu0
    %v482 = vadd.f32 0.0, %v481
    %483 = vmatprep.mubr.f32.mxu0 0.0
    %484 = vmatmul.mubr.f32.gmra.mrb[0].mxu0 %v402
    %v485 = vpop.f32.mrb[0].mxu0
    %v486 = vadd.f32 0.0, %v485
    %v487 = vpop.f32.mrb[0].mxu0
    %v488 = vadd.f32 0.0, %v487
    %489 = vmatprep.mubr.f32.mxu0 0.0
    %490 = vmatmul.mubr.f32.gmra.mrb[0].mxu0 %v405
    %v491 = vpop.f32.mrb[0].mxu0
    %v492 = vadd.f32 0.0, %v491
    %v493 = vpop.f32.mrb[0].mxu0
    %v494 = vadd.f32 0.0, %v493
    %495 = vmatprep.mubr.f32.mxu0 0.0
    %496 = vmatmul.mubr.f32.gmra.mrb[0].mxu0 %v408
    %v497 = vpop.f32.mrb[0].mxu0
    %v498 = vadd.f32 0.0, %v497
    %v499 = vpop.f32.mrb[0].mxu0
    %v500 = vadd.f32 0.0, %v499
    %501 = vmatprep.mubr.f32.mxu0 0.0
    %502 = vmatmul.mubr.f32.gmra.mrb[0].mxu0 %v411
    %v503 = vpop.f32.mrb[0].mxu0
    %v504 = vadd.f32 0.0, %v503
    %v505 = vpop.f32.mrb[0].mxu0
    %v506 = vadd.f32 0.0, %v505
    %507 = vdwg.mxu0
    %v508 = vadd.f32 %v348, %v480
    %v509 = vadd.f32 %v350, %v482
    %v510 = vadd.f32 %v354, %v486
    %v511 = vadd.f32 %v356, %v488
    %v512 = vadd.f32 %v360, %v492
    %v513 = vadd.f32 %v362, %v494
    %v514 = vadd.f32 %v366, %v498
    %v515 = vadd.f32 %v368, %v500
    %v516 = vadd.f32 %v372, %v504
    %v517 = vadd.f32 %v374, %v506
    %518 = vst [vmem:[#allocation5] sm:$0xff] %v509
    %519 = vst [vmem:[#allocation5 + $0x8] sm:$0xff] %v511
    %520 = vst [vmem:[#allocation5 + $0x10] sm:$0xff] %v513
    %521 = vst [vmem:[#allocation5 + $0x18] sm:$0xff] %v515
    %522 = vst [vmem:[#allocation5 + $0x20] sm:$0x3] %v517
    %v523 = vld [vmem:[%s2] sm:$0x1]
    %v525 = vlaneseq
    %v526 = vshrl.u32 %v525, 7
    %v527 = vsub.s32 0, %v526
    %v528 = vrot.slane %v523, %v527
    %v530 = vadd.f32 %v508, %v528
    %v531 = vadd.f32 %v510, %v528
    %v532 = vadd.f32 %v512, %v528
    %v533 = vadd.f32 %v514, %v528
    %v534 = vadd.f32 %v516, %v528
    %v535 = vmax.f32 %v530, 0.0
    %v536 = vmax.f32 %v531, 0.0
    %v537 = vmax.f32 %v532, 0.0
    %v538 = vmax.f32 %v533, 0.0
    %v539 = vmax.f32 %v534, 0.0
    %540 = vst [vmem:[#allocation3 + $0x1] sm:$0xff] %v535
    %541 = vst [vmem:[#allocation3 + $0x9] sm:$0xff] %v536
    %542 = vst [vmem:[#allocation3 + $0x11] sm:$0xfc] %v537
    %543 = vst [vmem:[#allocation3 + $0x19] sm:$0xff] %v538
    %544 = vst [vmem:[#allocation3 + $0x21] sm:$0x3] %v539
    %v545 = vld [vmem:[#allocation3] sm:$0xff]
    %v546 = vld [vmem:[#allocation3 + $0x8] sm:$0xff]
    %v547 = vld [vmem:[#allocation3 + $0x10] sm:$0xff]
    %v548 = vld [vmem:[#allocation3 + $0x18] sm:$0xff]
    %v549 = vld [vmem:[#allocation3 + $0x20] sm:$0x3]
    %v550 = vld [vmem:[#allocation11] sm:$0xff]
    %v551 = vld [vmem:[#allocation11 + $0x8] sm:$0xff]
    %v552 = vld [vmem:[#allocation11 + $0x10] sm:$0xff]
    %v553 = vld [vmem:[#allocation11 + $0x18] sm:$0xff]
    %v554 = vld [vmem:[#allocation11 + $0x20] sm:$0xff]
    %v555 = vld [vmem:[#allocation11 + $0x28] sm:$0xff]
    %v556 = vld [vmem:[#allocation11 + $0x30] sm:$0xff]
    %v557 = vld [vmem:[#allocation11 + $0x38] sm:$0xff]
    %v558 = vld [vmem:[#allocation11 + $0x40] sm:$0xff]
    %v559 = vld [vmem:[#allocation11 + $0x48] sm:$0xff]
    %v560 = vld [vmem:[#allocation11 + $0x50] sm:$0xff]
    %v561 = vld [vmem:[#allocation11 + $0x58] sm:$0xff]
    %v562 = vld [vmem:[#allocation11 + $0x60] sm:$0xff]
    %v563 = vld [vmem:[#allocation11 + $0x68] sm:$0xff]
    %v564 = vld [vmem:[#allocation11 + $0x70] sm:$0xff]
    %v565 = vld [vmem:[#allocation11 + $0x78] sm:$0xff]
    %v566 = vld [vmem:[#allocation3 + $0x1] sm:$0xff]
    %v567 = vld [vmem:[#allocation3 + $0x9] sm:$0xff]
    %v568 = vld [vmem:[#allocation3 + $0x11] sm:$0xff]
    %v569 = vld [vmem:[#allocation3 + $0x19] sm:$0xff]
    %v570 = vld [vmem:[#allocation3 + $0x21] sm:$0x3]
    %s571 = scalar_lea.vmem [#allocation11], 128
    %v572 = vld [vmem:[%s571] sm:$0xff]
    %v573 = vld [vmem:[%s571 + $0x8] sm:$0xff]
    %v574 = vld [vmem:[%s571 + $0x10] sm:$0xff]
    %v575 = vld [vmem:[%s571 + $0x18] sm:$0xff]
    %v576 = vld [vmem:[%s571 + $0x20] sm:$0xff]
    %v577 = vld [vmem:[%s571 + $0x28] sm:$0xff]
    %v578 = vld [vmem:[%s571 + $0x30] sm:$0xff]
    %v579 = vld [vmem:[%s571 + $0x38] sm:$0xff]
    %v580 = vld [vmem:[%s571 + $0x40] sm:$0xff]
    %v581 = vld [vmem:[%s571 + $0x48] sm:$0xff]
    %v582 = vld [vmem:[%s571 + $0x50] sm:$0xff]
    %v583 = vld [vmem:[%s571 + $0x58] sm:$0xff]
    %v584 = vld [vmem:[%s571 + $0x60] sm:$0xff]
    %v585 = vld [vmem:[%s571 + $0x68] sm:$0xff]
    %v586 = vld [vmem:[%s571 + $0x70] sm:$0xff]
    %v587 = vld [vmem:[%s571 + $0x78] sm:$0xff]
    %588 = vmatprep.subr.mxu0 0.0
    %589 = vmatpush1.msra.mxu0 %v572
    %590 = vmatprep.subr.mxu0 0.0
    %591 = vmatpush1.msra.mxu0 %v573
    %592 = vmatprep.subr.mxu0 0.0
    %593 = vmatpush1.msra.mxu0 %v574
    %594 = vmatprep.subr.mxu0 0.0
    %595 = vmatpush1.msra.mxu0 %v575
    %596 = vmatprep.subr.mxu0 0.0
    %597 = vmatpush1.msra.mxu0 %v576
    %598 = vmatprep.subr.mxu0 0.0
    %599 = vmatpush1.msra.mxu0 %v577
    %600 = vmatprep.subr.mxu0 0.0
    %601 = vmatpush1.msra.mxu0 %v578
    %602 = vmatprep.subr.mxu0 0.0
    %603 = vmatpush1.msra.mxu0 %v579
    %604 = vmatprep.subr.mxu0 0.0
    %605 = vmatpush1.msra.mxu0 %v580
    %606 = vmatprep.subr.mxu0 0.0
    %607 = vmatpush1.msra.mxu0 %v581
    %608 = vmatprep.subr.mxu0 0.0
    %609 = vmatpush1.msra.mxu0 %v582
    %610 = vmatprep.subr.mxu0 0.0
    %611 = vmatpush1.msra.mxu0 %v583
    %612 = vmatprep.subr.mxu0 0.0
    %613 = vmatpush1.msra.mxu0 %v584
    %614 = vmatprep.subr.mxu0 0.0
    %615 = vmatpush1.msra.mxu0 %v585
    %616 = vmatprep.subr.mxu0 0.0
    %617 = vmatpush1.msra.mxu0 %v586
    %618 = vmatprep.subr.mxu0 0.0
    %619 = vmatpush1.msra.mxu0 %v587
    %620 = vmatprep.subr.mxu0 0.0
    %621 = vmatpush1.msra.mxu0 0.0
    %622 = vmatprep.subr.mxu0 0.0
    %623 = vmatpush1.msra.mxu0 0.0
    %624 = vmatprep.subr.mxu0 0.0
    %625 = vmatpush1.msra.mxu0 0.0
    %626 = vmatprep.subr.mxu0 0.0
    %627 = vmatpush1.msra.mxu0 0.0
    %628 = vmatprep.subr.mxu0 0.0
    %629 = vmatpush1.msra.mxu0 0.0
    %630 = vmatprep.subr.mxu0 0.0
    %631 = vmatpush1.msra.mxu0 0.0
    %632 = vmatprep.subr.mxu0 0.0
    %633 = vmatpush1.msra.mxu0 0.0
    %634 = vmatprep.subr.mxu0 0.0
    %635 = vmatpush1.msra.mxu0 0.0
    %636 = vmatprep.subr.mxu0 0.0
    %637 = vmatpush1.msra.mxu0 0.0
    %638 = vmatprep.subr.mxu0 0.0
    %639 = vmatpush1.msra.mxu0 0.0
    %640 = vmatprep.subr.mxu0 0.0
    %641 = vmatpush1.msra.mxu0 0.0
    %642 = vmatprep.subr.mxu0 0.0
    %643 = vmatpush1.msra.mxu0 0.0
    %644 = vmatprep.subr.mxu0 0.0
    %645 = vmatpush1.msra.mxu0 0.0
    %646 = vmatprep.subr.mxu0 0.0
    %647 = vmatpush1.msra.mxu0 0.0
    %648 = vmatprep.subr.mxu0 0.0
    %649 = vmatpush1.msra.mxu0 0.0
    %650 = vmatprep.subr.mxu0 0.0
    %651 = vmatpush1.msra.mxu0 0.0
    %652 = vmatprep.mubr.f32.mxu0 0.0
    %653 = vmatmul.mubr.f32.gmra.mrb[0].mxu0 %v566
    %v654 = vpop.f32.mrb[0].mxu0
    %v655 = vadd.f32 0.0, %v654
    %v656 = vpop.f32.mrb[0].mxu0
    %657 = vmatprep.mubr.f32.mxu0 0.0
    %658 = vmatmul.mubr.f32.gmra.mrb[0].mxu0 %v567
    %v659 = vpop.f32.mrb[0].mxu0
    %v660 = vadd.f32 0.0, %v659
    %v661 = vpop.f32.mrb[0].mxu0
    %662 = vmatprep.mubr.f32.mxu0 0.0
    %663 = vmatmul.mubr.f32.gmra.mrb[0].mxu0 %v568
    %v664 = vpop.f32.mrb[0].mxu0
    %v665 = vadd.f32 0.0, %v664
    %v666 = vpop.f32.mrb[0].mxu0
    %667 = vmatprep.mubr.f32.mxu0 0.0
    %668 = vmatmul.mubr.f32.gmra.mrb[0].mxu0 %v569
    %v669 = vpop.f32.mrb[0].mxu0
    %v670 = vadd.f32 0.0, %v669
    %v671 = vpop.f32.mrb[0].mxu0
    %672 = vmatprep.mubr.f32.mxu0 0.0
    %673 = vmatmul.mubr.f32.gmra.mrb[0].mxu0 %v570
    %v674 = vpop.f32.mrb[0].mxu0
    %v675 = vadd.f32 0.0, %v674
    %v676 = vpop.f32.mrb[0].mxu0
    %677 = vdwg.mxu0
    %678 = vmatprep.subr.mxu0 0.0
    %679 = vmatpush1.msra.mxu0 %v550
    %680 = vmatprep.subr.mxu0 0.0
    %681 = vmatpush1.msra.mxu0 %v551
    %682 = vmatprep.subr.mxu0 0.0
    %683 = vmatpush1.msra.mxu0 %v552
    %684 = vmatprep.subr.mxu0 0.0
    %685 = vmatpush1.msra.mxu0 %v553
    %686 = vmatprep.subr.mxu0 0.0
    %687 = vmatpush1.msra.mxu0 %v554
    %688 = vmatprep.subr.mxu0 0.0
    %689 = vmatpush1.msra.mxu0 %v555
    %690 = vmatprep.subr.mxu0 0.0
    %691 = vmatpush1.msra.mxu0 %v556
    %692 = vmatprep.subr.mxu0 0.0
    %693 = vmatpush1.msra.mxu0 %v557
    %694 = vmatprep.subr.mxu0 0.0
    %695 = vmatpush1.msra.mxu0 %v558
    %696 = vmatprep.subr.mxu0 0.0
    %697 = vmatpush1.msra.mxu0 %v559
    %698 = vmatprep.subr.mxu0 0.0
    %699 = vmatpush1.msra.mxu0 %v560
    %700 = vmatprep.subr.mxu0 0.0
    %701 = vmatpush1.msra.mxu0 %v561
    %702 = vmatprep.subr.mxu0 0.0
    %703 = vmatpush1.msra.mxu0 %v562
    %704 = vmatprep.subr.mxu0 0.0
    %705 = vmatpush1.msra.mxu0 %v563
    %706 = vmatprep.subr.mxu0 0.0
    %707 = vmatpush1.msra.mxu0 %v564
    %708 = vmatprep.subr.mxu0 0.0
    %709 = vmatpush1.msra.mxu0 %v565
    %710 = vmatprep.subr.mxu0 0.0
    %711 = vmatpush1.msra.mxu0 0.0
    %712 = vmatprep.subr.mxu0 0.0
    %713 = vmatpush1.msra.mxu0 0.0
    %714 = vmatprep.subr.mxu0 0.0
    %715 = vmatpush1.msra.mxu0 0.0
    %716 = vmatprep.subr.mxu0 0.0
    %717 = vmatpush1.msra.mxu0 0.0
    %718 = vmatprep.subr.mxu0 0.0
    %719 = vmatpush1.msra.mxu0 0.0
    %720 = vmatprep.subr.mxu0 0.0
    %721 = vmatpush1.msra.mxu0 0.0
    %722 = vmatprep.subr.mxu0 0.0
    %723 = vmatpush1.msra.mxu0 0.0
    %724 = vmatprep.subr.mxu0 0.0
    %725 = vmatpush1.msra.mxu0 0.0
    %726 = vmatprep.subr.mxu0 0.0
    %727 = vmatpush1.msra.mxu0 0.0
    %728 = vmatprep.subr.mxu0 0.0
    %729 = vmatpush1.msra.mxu0 0.0
    %730 = vmatprep.subr.mxu0 0.0
    %731 = vmatpush1.msra.mxu0 0.0
    %732 = vmatprep.subr.mxu0 0.0
    %733 = vmatpush1.msra.mxu0 0.0
    %734 = vmatprep.subr.mxu0 0.0
    %735 = vmatpush1.msra.mxu0 0.0
    %736 = vmatprep.subr.mxu0 0.0
    %737 = vmatpush1.msra.mxu0 0.0
    %738 = vmatprep.subr.mxu0 0.0
    %739 = vmatpush1.msra.mxu0 0.0
    %740 = vmatprep.subr.mxu0 0.0
    %741 = vmatpush1.msra.mxu0 0.0
    %742 = vmatprep.mubr.f32.mxu0 0.0
    %743 = vmatmul.mubr.f32.gmra.mrb[0].mxu0 %v545
    %v744 = vpop.f32.mrb[0].mxu0
    %v745 = vadd.f32 %v655, %v744
    %v746 = vpop.f32.mrb[0].mxu0
    %747 = vmatprep.mubr.f32.mxu0 0.0
    %748 = vmatmul.mubr.f32.gmra.mrb[0].mxu0 %v546
    %v749 = vpop.f32.mrb[0].mxu0
    %v750 = vadd.f32 %v660, %v749
    %v751 = vpop.f32.mrb[0].mxu0
    %752 = vmatprep.mubr.f32.mxu0 0.0
    %753 = vmatmul.mubr.f32.gmra.mrb[0].mxu0 %v547
    %v754 = vpop.f32.mrb[0].mxu0
    %v755 = vadd.f32 %v665, %v754
    %v756 = vpop.f32.mrb[0].mxu0
    %757 = vmatprep.mubr.f32.mxu0 0.0
    %758 = vmatmul.mubr.f32.gmra.mrb[0].mxu0 %v548
    %v759 = vpop.f32.mrb[0].mxu0
    %v760 = vadd.f32 %v670, %v759
    %v761 = vpop.f32.mrb[0].mxu0
    %762 = vmatprep.mubr.f32.mxu0 0.0
    %763 = vmatmul.mubr.f32.gmra.mrb[0].mxu0 %v549
    %v764 = vpop.f32.mrb[0].mxu0
    %v765 = vadd.f32 %v675, %v764
    %v766 = vpop.f32.mrb[0].mxu0
    %767 = vdwg.mxu0
    %v768 = vld [vmem:[#allocation3 + $0x2] sm:$0xff]
    %v769 = vld [vmem:[#allocation3 + $0xa] sm:$0xff]
    %v770 = vld [vmem:[#allocation3 + $0x12] sm:$0xff]
    %v771 = vld [vmem:[#allocation3 + $0x1a] sm:$0xff]
    %v772 = vld [vmem:[#allocation3 + $0x22] sm:$0x3]
    %s773 = scalar_lea.vmem [#allocation11], 256
    %v774 = vld [vmem:[%s773] sm:$0xff]
    %v775 = vld [vmem:[%s773 + $0x8] sm:$0xff]
    %v776 = vld [vmem:[%s773 + $0x10] sm:$0xff]
    %v777 = vld [vmem:[%s773 + $0x18] sm:$0xff]
    %v778 = vld [vmem:[%s773 + $0x20] sm:$0xff]
    %v779 = vld [vmem:[%s773 + $0x28] sm:$0xff]
    %v780 = vld [vmem:[%s773 + $0x30] sm:$0xff]
    %v781 = vld [vmem:[%s773 + $0x38] sm:$0xff]
    %v782 = vld [vmem:[%s773 + $0x40] sm:$0xff]
    %v783 = vld [vmem:[%s773 + $0x48] sm:$0xff]
    %v784 = vld [vmem:[%s773 + $0x50] sm:$0xff]
    %v785 = vld [vmem:[%s773 + $0x58] sm:$0xff]
    %v786 = vld [vmem:[%s773 + $0x60] sm:$0xff]
    %v787 = vld [vmem:[%s773 + $0x68] sm:$0xff]
    %v788 = vld [vmem:[%s773 + $0x70] sm:$0xff]
    %v789 = vld [vmem:[%s773 + $0x78] sm:$0xff]
    %790 = vmatprep.subr.mxu0 0.0
    %791 = vmatpush1.msra.mxu0 %v774
    %792 = vmatprep.subr.mxu0 0.0
    %793 = vmatpush1.msra.mxu0 %v775
    %794 = vmatprep.subr.mxu0 0.0
    %795 = vmatpush1.msra.mxu0 %v776
    %796 = vmatprep.subr.mxu0 0.0
    %797 = vmatpush1.msra.mxu0 %v777
    %798 = vmatprep.subr.mxu0 0.0
    %799 = vmatpush1.msra.mxu0 %v778
    %800 = vmatprep.subr.mxu0 0.0
    %801 = vmatpush1.msra.mxu0 %v779
    %802 = vmatprep.subr.mxu0 0.0
    %803 = vmatpush1.msra.mxu0 %v780
    %804 = vmatprep.subr.mxu0 0.0
    %805 = vmatpush1.msra.mxu0 %v781
    %806 = vmatprep.subr.mxu0 0.0
    %807 = vmatpush1.msra.mxu0 %v782
    %808 = vmatprep.subr.mxu0 0.0
    %809 = vmatpush1.msra.mxu0 %v783
    %810 = vmatprep.subr.mxu0 0.0
    %811 = vmatpush1.msra.mxu0 %v784
    %812 = vmatprep.subr.mxu0 0.0
    %813 = vmatpush1.msra.mxu0 %v785
    %814 = vmatprep.subr.mxu0 0.0
    %815 = vmatpush1.msra.mxu0 %v786
    %816 = vmatprep.subr.mxu0 0.0
    %817 = vmatpush1.msra.mxu0 %v787
    %818 = vmatprep.subr.mxu0 0.0
    %819 = vmatpush1.msra.mxu0 %v788
    %820 = vmatprep.subr.mxu0 0.0
    %821 = vmatpush1.msra.mxu0 %v789
    %822 = vmatprep.subr.mxu0 0.0
    %823 = vmatpush1.msra.mxu0 0.0
    %824 = vmatprep.subr.mxu0 0.0
    %825 = vmatpush1.msra.mxu0 0.0
    %826 = vmatprep.subr.mxu0 0.0
    %827 = vmatpush1.msra.mxu0 0.0
    %828 = vmatprep.subr.mxu0 0.0
    %829 = vmatpush1.msra.mxu0 0.0
    %830 = vmatprep.subr.mxu0 0.0
    %831 = vmatpush1.msra.mxu0 0.0
    %832 = vmatprep.subr.mxu0 0.0
    %833 = vmatpush1.msra.mxu0 0.0
    %834 = vmatprep.subr.mxu0 0.0
    %835 = vmatpush1.msra.mxu0 0.0
    %836 = vmatprep.subr.mxu0 0.0
    %837 = vmatpush1.msra.mxu0 0.0
    %838 = vmatprep.subr.mxu0 0.0
    %839 = vmatpush1.msra.mxu0 0.0
    %840 = vmatprep.subr.mxu0 0.0
    %841 = vmatpush1.msra.mxu0 0.0
    %842 = vmatprep.subr.mxu0 0.0
    %843 = vmatpush1.msra.mxu0 0.0
    %844 = vmatprep.subr.mxu0 0.0
    %845 = vmatpush1.msra.mxu0 0.0
    %846 = vmatprep.subr.mxu0 0.0
    %847 = vmatpush1.msra.mxu0 0.0
    %848 = vmatprep.subr.mxu0 0.0
    %849 = vmatpush1.msra.mxu0 0.0
    %850 = vmatprep.subr.mxu0 0.0
    %851 = vmatpush1.msra.mxu0 0.0
    %852 = vmatprep.subr.mxu0 0.0
    %853 = vmatpush1.msra.mxu0 0.0
    %854 = vmatprep.mubr.f32.mxu0 0.0
    %855 = vmatmul.mubr.f32.gmra.mrb[0].mxu0 %v768
    %v856 = vpop.f32.mrb[0].mxu0
    %v857 = vadd.f32 0.0, %v856
    %v858 = vpop.f32.mrb[0].mxu0
    %859 = vmatprep.mubr.f32.mxu0 0.0
    %860 = vmatmul.mubr.f32.gmra.mrb[0].mxu0 %v769
    %v861 = vpop.f32.mrb[0].mxu0
    %v862 = vadd.f32 0.0, %v861
    %v863 = vpop.f32.mrb[0].mxu0
    %864 = vmatprep.mubr.f32.mxu0 0.0
    %865 = vmatmul.mubr.f32.gmra.mrb[0].mxu0 %v770
    %v866 = vpop.f32.mrb[0].mxu0
    %v867 = vadd.f32 0.0, %v866
    %v868 = vpop.f32.mrb[0].mxu0
    %869 = vmatprep.mubr.f32.mxu0 0.0
    %870 = vmatmul.mubr.f32.gmra.mrb[0].mxu0 %v771
    %v871 = vpop.f32.mrb[0].mxu0
    %v872 = vadd.f32 0.0, %v871
    %v873 = vpop.f32.mrb[0].mxu0
    %874 = vmatprep.mubr.f32.mxu0 0.0
    %875 = vmatmul.mubr.f32.gmra.mrb[0].mxu0 %v772
    %v876 = vpop.f32.mrb[0].mxu0
    %v877 = vadd.f32 0.0, %v876
    %v878 = vpop.f32.mrb[0].mxu0
    %879 = vdwg.mxu0
    %v880 = vadd.f32 %v745, %v857
    %v881 = vadd.f32 %v750, %v862
    %v882 = vadd.f32 %v755, %v867
    %v883 = vadd.f32 %v760, %v872
    %v884 = vadd.f32 %v765, %v877
    %v885 = vld [vmem:[%s4] sm:$0x1]
    %v887 = vlaneseq
    %v888 = vshrl.u32 %v887, 7
    %v889 = vsub.s32 0, %v888
    %v890 = vrot.slane %v885, %v889
    %v892 = vadd.f32 %v880, %v890
    %v893 = vadd.f32 %v881, %v890
    %v894 = vadd.f32 %v882, %v890
    %v895 = vadd.f32 %v883, %v890
    %v896 = vadd.f32 %v884, %v890
    %v897 = vmax.f32 %v892, 0.0
    %v898 = vmax.f32 %v893, 0.0
    %v899 = vmax.f32 %v894, 0.0
    %v900 = vmax.f32 %v895, 0.0
    %v901 = vmax.f32 %v896, 0.0
    %902 = vst [vmem:[#allocation4 + $0x1] sm:$0xff] %v897
    %903 = vst [vmem:[#allocation4 + $0x9] sm:$0xff] %v898
    %904 = vst [vmem:[#allocation4 + $0x11] sm:$0xfc] %v899
    %905 = vst [vmem:[#allocation4 + $0x19] sm:$0xff] %v900
    %906 = vst [vmem:[#allocation4 + $0x21] sm:$0x3] %v901
    %v907 = vld [vmem:[#allocation4] sm:$0xff]
    %v908 = vld [vmem:[#allocation4 + $0x8] sm:$0xff]
    %v909 = vld [vmem:[#allocation4 + $0x10] sm:$0xff]
    %v910 = vld [vmem:[#allocation4 + $0x18] sm:$0xff]
    %v911 = vld [vmem:[#allocation4 + $0x20] sm:$0x3]
    %v912 = vld [vmem:[#allocation12] sm:$0xff]
    %v913 = vld [vmem:[#allocation12 + $0x8] sm:$0xff]
    %v914 = vld [vmem:[#allocation12 + $0x10] sm:$0xff]
    %v915 = vld [vmem:[#allocation12 + $0x18] sm:$0xff]
    %v916 = vld [vmem:[#allocation12 + $0x20] sm:$0xff]
    %v917 = vld [vmem:[#allocation12 + $0x28] sm:$0xff]
    %v918 = vld [vmem:[#allocation12 + $0x30] sm:$0xff]
    %v919 = vld [vmem:[#allocation12 + $0x38] sm:$0xff]
    %v920 = vld [vmem:[#allocation12 + $0x40] sm:$0xff]
    %v921 = vld [vmem:[#allocation12 + $0x48] sm:$0xff]
    %v922 = vld [vmem:[#allocation12 + $0x50] sm:$0xff]
    %v923 = vld [vmem:[#allocation12 + $0x58] sm:$0xff]
    %v924 = vld [vmem:[#allocation12 + $0x60] sm:$0xff]
    %v925 = vld [vmem:[#allocation12 + $0x68] sm:$0xff]
    %v926 = vld [vmem:[#allocation12 + $0x70] sm:$0xff]
    %v927 = vld [vmem:[#allocation12 + $0x78] sm:$0xff]
    %v928 = vld [vmem:[#allocation4 + $0x1] sm:$0xff]
    %v929 = vld [vmem:[#allocation4 + $0x9] sm:$0xff]
    %v930 = vld [vmem:[#allocation4 + $0x11] sm:$0xff]
    %v931 = vld [vmem:[#allocation4 + $0x19] sm:$0xff]
    %v932 = vld [vmem:[#allocation4 + $0x21] sm:$0x3]
    %s933 = scalar_lea.vmem [#allocation12], 128
    %v934 = vld [vmem:[%s933] sm:$0xff]
    %v935 = vld [vmem:[%s933 + $0x8] sm:$0xff]
    %v936 = vld [vmem:[%s933 + $0x10] sm:$0xff]
    %v937 = vld [vmem:[%s933 + $0x18] sm:$0xff]
    %v938 = vld [vmem:[%s933 + $0x20] sm:$0xff]
    %v939 = vld [vmem:[%s933 + $0x28] sm:$0xff]
    %v940 = vld [vmem:[%s933 + $0x30] sm:$0xff]
    %v941 = vld [vmem:[%s933 + $0x38] sm:$0xff]
    %v942 = vld [vmem:[%s933 + $0x40] sm:$0xff]
    %v943 = vld [vmem:[%s933 + $0x48] sm:$0xff]
    %v944 = vld [vmem:[%s933 + $0x50] sm:$0xff]
    %v945 = vld [vmem:[%s933 + $0x58] sm:$0xff]
    %v946 = vld [vmem:[%s933 + $0x60] sm:$0xff]
    %v947 = vld [vmem:[%s933 + $0x68] sm:$0xff]
    %v948 = vld [vmem:[%s933 + $0x70] sm:$0xff]
    %v949 = vld [vmem:[%s933 + $0x78] sm:$0xff]
    %950 = vmatprep.subr.mxu0 0.0
    %951 = vmatpush1.msra.mxu0 %v934
    %952 = vmatprep.subr.mxu0 0.0
    %953 = vmatpush1.msra.mxu0 %v935
    %954 = vmatprep.subr.mxu0 0.0
    %955 = vmatpush1.msra.mxu0 %v936
    %956 = vmatprep.subr.mxu0 0.0
    %957 = vmatpush1.msra.mxu0 %v937
    %958 = vmatprep.subr.mxu0 0.0
    %959 = vmatpush1.msra.mxu0 %v938
    %960 = vmatprep.subr.mxu0 0.0
    %961 = vmatpush1.msra.mxu0 %v939
    %962 = vmatprep.subr.mxu0 0.0
    %963 = vmatpush1.msra.mxu0 %v940
    %964 = vmatprep.subr.mxu0 0.0
    %965 = vmatpush1.msra.mxu0 %v941
    %966 = vmatprep.subr.mxu0 0.0
    %967 = vmatpush1.msra.mxu0 %v942
    %968 = vmatprep.subr.mxu0 0.0
    %969 = vmatpush1.msra.mxu0 %v943
    %970 = vmatprep.subr.mxu0 0.0
    %971 = vmatpush1.msra.mxu0 %v944
    %972 = vmatprep.subr.mxu0 0.0
    %973 = vmatpush1.msra.mxu0 %v945
    %974 = vmatprep.subr.mxu0 0.0
    %975 = vmatpush1.msra.mxu0 %v946
    %976 = vmatprep.subr.mxu0 0.0
    %977 = vmatpush1.msra.mxu0 %v947
    %978 = vmatprep.subr.mxu0 0.0
    %979 = vmatpush1.msra.mxu0 %v948
    %980 = vmatprep.subr.mxu0 0.0
    %981 = vmatpush1.msra.mxu0 %v949
    %982 = vmatprep.subr.mxu0 0.0
    %983 = vmatpush1.msra.mxu0 0.0
    %984 = vmatprep.subr.mxu0 0.0
    %985 = vmatpush1.msra.mxu0 0.0
    %986 = vmatprep.subr.mxu0 0.0
    %987 = vmatpush1.msra.mxu0 0.0
    %988 = vmatprep.subr.mxu0 0.0
    %989 = vmatpush1.msra.mxu0 0.0
    %990 = vmatprep.subr.mxu0 0.0
    %991 = vmatpush1.msra.mxu0 0.0
    %992 = vmatprep.subr.mxu0 0.0
    %993 = vmatpush1.msra.mxu0 0.0
    %994 = vmatprep.subr.mxu0 0.0
    %995 = vmatpush1.msra.mxu0 0.0
    %996 = vmatprep.subr.mxu0 0.0
    %997 = vmatpush1.msra.mxu0 0.0
    %998 = vmatprep.subr.mxu0 0.0
    %999 = vmatpush1.msra.mxu0 0.0
    %1000 = vmatprep.subr.mxu0 0.0
    %1001 = vmatpush1.msra.mxu0 0.0
    %1002 = vmatprep.subr.mxu0 0.0
    %1003 = vmatpush1.msra.mxu0 0.0
    %1004 = vmatprep.subr.mxu0 0.0
    %1005 = vmatpush1.msra.mxu0 0.0
    %1006 = vmatprep.subr.mxu0 0.0
    %1007 = vmatpush1.msra.mxu0 0.0
    %1008 = vmatprep.subr.mxu0 0.0
    %1009 = vmatpush1.msra.mxu0 0.0
    %1010 = vmatprep.subr.mxu0 0.0
    %1011 = vmatpush1.msra.mxu0 0.0
    %1012 = vmatprep.subr.mxu0 0.0
    %1013 = vmatpush1.msra.mxu0 0.0
    %1014 = vmatprep.mubr.f32.mxu0 0.0
    %1015 = vmatmul.mubr.f32.gmra.mrb[0].mxu0 %v928
    %v1016 = vpop.f32.mrb[0].mxu0
    %v1017 = vadd.f32 0.0, %v1016
    %v1018 = vpop.f32.mrb[0].mxu0
    %1019 = vmatprep.mubr.f32.mxu0 0.0
    %1020 = vmatmul.mubr.f32.gmra.mrb[0].mxu0 %v929
    %v1021 = vpop.f32.mrb[0].mxu0
    %v1022 = vadd.f32 0.0, %v1021
    %v1023 = vpop.f32.mrb[0].mxu0
    %1024 = vmatprep.mubr.f32.mxu0 0.0
    %1025 = vmatmul.mubr.f32.gmra.mrb[0].mxu0 %v930
    %v1026 = vpop.f32.mrb[0].mxu0
    %v1027 = vadd.f32 0.0, %v1026
    %v1028 = vpop.f32.mrb[0].mxu0
    %1029 = vmatprep.mubr.f32.mxu0 0.0
    %1030 = vmatmul.mubr.f32.gmra.mrb[0].mxu0 %v931
    %v1031 = vpop.f32.mrb[0].mxu0
    %v1032 = vadd.f32 0.0, %v1031
    %v1033 = vpop.f32.mrb[0].mxu0
    %1034 = vmatprep.mubr.f32.mxu0 0.0
    %1035 = vmatmul.mubr.f32.gmra.mrb[0].mxu0 %v932
    %v1036 = vpop.f32.mrb[0].mxu0
    %v1037 = vadd.f32 0.0, %v1036
    %v1038 = vpop.f32.mrb[0].mxu0
    %1039 = vdwg.mxu0
    %1040 = vmatprep.subr.mxu0 0.0
    %1041 = vmatpush1.msra.mxu0 %v912
    %1042 = vmatprep.subr.mxu0 0.0
    %1043 = vmatpush1.msra.mxu0 %v913
    %1044 = vmatprep.subr.mxu0 0.0
    %1045 = vmatpush1.msra.mxu0 %v914
    %1046 = vmatprep.subr.mxu0 0.0
    %1047 = vmatpush1.msra.mxu0 %v915
    %1048 = vmatprep.subr.mxu0 0.0
    %1049 = vmatpush1.msra.mxu0 %v916
    %1050 = vmatprep.subr.mxu0 0.0
    %1051 = vmatpush1.msra.mxu0 %v917
    %1052 = vmatprep.subr.mxu0 0.0
    %1053 = vmatpush1.msra.mxu0 %v918
    %1054 = vmatprep.subr.mxu0 0.0
    %1055 = vmatpush1.msra.mxu0 %v919
    %1056 = vmatprep.subr.mxu0 0.0
    %1057 = vmatpush1.msra.mxu0 %v920
    %1058 = vmatprep.subr.mxu0 0.0
    %1059 = vmatpush1.msra.mxu0 %v921
    %1060 = vmatprep.subr.mxu0 0.0
    %1061 = vmatpush1.msra.mxu0 %v922
    %1062 = vmatprep.subr.mxu0 0.0
    %1063 = vmatpush1.msra.mxu0 %v923
    %1064 = vmatprep.subr.mxu0 0.0
    %1065 = vmatpush1.msra.mxu0 %v924
    %1066 = vmatprep.subr.mxu0 0.0
    %1067 = vmatpush1.msra.mxu0 %v925
    %1068 = vmatprep.subr.mxu0 0.0
    %1069 = vmatpush1.msra.mxu0 %v926
    %1070 = vmatprep.subr.mxu0 0.0
    %1071 = vmatpush1.msra.mxu0 %v927
    %1072 = vmatprep.subr.mxu0 0.0
    %1073 = vmatpush1.msra.mxu0 0.0
    %1074 = vmatprep.subr.mxu0 0.0
    %1075 = vmatpush1.msra.mxu0 0.0
    %1076 = vmatprep.subr.mxu0 0.0
    %1077 = vmatpush1.msra.mxu0 0.0
    %1078 = vmatprep.subr.mxu0 0.0
    %1079 = vmatpush1.msra.mxu0 0.0
    %1080 = vmatprep.subr.mxu0 0.0
    %1081 = vmatpush1.msra.mxu0 0.0
    %1082 = vmatprep.subr.mxu0 0.0
    %1083 = vmatpush1.msra.mxu0 0.0
    %1084 = vmatprep.subr.mxu0 0.0
    %1085 = vmatpush1.msra.mxu0 0.0
    %1086 = vmatprep.subr.mxu0 0.0
    %1087 = vmatpush1.msra.mxu0 0.0
    %1088 = vmatprep.subr.mxu0 0.0
    %1089 = vmatpush1.msra.mxu0 0.0
    %1090 = vmatprep.subr.mxu0 0.0
    %1091 = vmatpush1.msra.mxu0 0.0
    %1092 = vmatprep.subr.mxu0 0.0
    %1093 = vmatpush1.msra.mxu0 0.0
    %1094 = vmatprep.subr.mxu0 0.0
    %1095 = vmatpush1.msra.mxu0 0.0
    %1096 = vmatprep.subr.mxu0 0.0
    %1097 = vmatpush1.msra.mxu0 0.0
    %1098 = vmatprep.subr.mxu0 0.0
    %1099 = vmatpush1.msra.mxu0 0.0
    %1100 = vmatprep.subr.mxu0 0.0
    %1101 = vmatpush1.msra.mxu0 0.0
    %1102 = vmatprep.subr.mxu0 0.0
    %1103 = vmatpush1.msra.mxu0 0.0
    %1104 = vmatprep.mubr.f32.mxu0 0.0
    %1105 = vmatmul.mubr.f32.gmra.mrb[0].mxu0 %v907
    %v1106 = vpop.f32.mrb[0].mxu0
    %v1107 = vadd.f32 %v1017, %v1106
    %v1108 = vpop.f32.mrb[0].mxu0
    %1109 = vmatprep.mubr.f32.mxu0 0.0
    %1110 = vmatmul.mubr.f32.gmra.mrb[0].mxu0 %v908
    %v1111 = vpop.f32.mrb[0].mxu0
    %v1112 = vadd.f32 %v1022, %v1111
    %v1113 = vpop.f32.mrb[0].mxu0
    %1114 = vmatprep.mubr.f32.mxu0 0.0
    %1115 = vmatmul.mubr.f32.gmra.mrb[0].mxu0 %v909
    %v1116 = vpop.f32.mrb[0].mxu0
    %v1117 = vadd.f32 %v1027, %v1116
    %v1118 = vpop.f32.mrb[0].mxu0
    %1119 = vmatprep.mubr.f32.mxu0 0.0
    %1120 = vmatmul.mubr.f32.gmra.mrb[0].mxu0 %v910
    %v1121 = vpop.f32.mrb[0].mxu0
    %v1122 = vadd.f32 %v1032, %v1121
    %v1123 = vpop.f32.mrb[0].mxu0
    %1124 = vmatprep.mubr.f32.mxu0 0.0
    %1125 = vmatmul.mubr.f32.gmra.mrb[0].mxu0 %v911
    %v1126 = vpop.f32.mrb[0].mxu0
    %v1127 = vadd.f32 %v1037, %v1126
    %v1128 = vpop.f32.mrb[0].mxu0
    %1129 = vdwg.mxu0
    %v1130 = vld [vmem:[#allocation4 + $0x2] sm:$0xff]
    %v1131 = vld [vmem:[#allocation4 + $0xa] sm:$0xff]
    %v1132 = vld [vmem:[#allocation4 + $0x12] sm:$0xff]
    %v1133 = vld [vmem:[#allocation4 + $0x1a] sm:$0xff]
    %v1134 = vld [vmem:[#allocation4 + $0x22] sm:$0x3]
    %s1135 = scalar_lea.vmem [#allocation12], 256
    %v1136 = vld [vmem:[%s1135] sm:$0xff]
    %v1137 = vld [vmem:[%s1135 + $0x8] sm:$0xff]
    %v1138 = vld [vmem:[%s1135 + $0x10] sm:$0xff]
    %v1139 = vld [vmem:[%s1135 + $0x18] sm:$0xff]
    %v1140 = vld [vmem:[%s1135 + $0x20] sm:$0xff]
    %v1141 = vld [vmem:[%s1135 + $0x28] sm:$0xff]
    %v1142 = vld [vmem:[%s1135 + $0x30] sm:$0xff]
    %v1143 = vld [vmem:[%s1135 + $0x38] sm:$0xff]
    %v1144 = vld [vmem:[%s1135 + $0x40] sm:$0xff]
    %v1145 = vld [vmem:[%s1135 + $0x48] sm:$0xff]
    %v1146 = vld [vmem:[%s1135 + $0x50] sm:$0xff]
    %v1147 = vld [vmem:[%s1135 + $0x58] sm:$0xff]
    %v1148 = vld [vmem:[%s1135 + $0x60] sm:$0xff]
    %v1149 = vld [vmem:[%s1135 + $0x68] sm:$0xff]
    %v1150 = vld [vmem:[%s1135 + $0x70] sm:$0xff]
    %v1151 = vld [vmem:[%s1135 + $0x78] sm:$0xff]
    %1152 = vmatprep.subr.mxu0 0.0
    %1153 = vmatpush1.msra.mxu0 %v1136
    %1154 = vmatprep.subr.mxu0 0.0
    %1155 = vmatpush1.msra.mxu0 %v1137
    %1156 = vmatprep.subr.mxu0 0.0
    %1157 = vmatpush1.msra.mxu0 %v1138
    %1158 = vmatprep.subr.mxu0 0.0
    %1159 = vmatpush1.msra.mxu0 %v1139
    %1160 = vmatprep.subr.mxu0 0.0
    %1161 = vmatpush1.msra.mxu0 %v1140
    %1162 = vmatprep.subr.mxu0 0.0
    %1163 = vmatpush1.msra.mxu0 %v1141
    %1164 = vmatprep.subr.mxu0 0.0
    %1165 = vmatpush1.msra.mxu0 %v1142
    %1166 = vmatprep.subr.mxu0 0.0
    %1167 = vmatpush1.msra.mxu0 %v1143
    %1168 = vmatprep.subr.mxu0 0.0
    %1169 = vmatpush1.msra.mxu0 %v1144
    %1170 = vmatprep.subr.mxu0 0.0
    %1171 = vmatpush1.msra.mxu0 %v1145
    %1172 = vmatprep.subr.mxu0 0.0
    %1173 = vmatpush1.msra.mxu0 %v1146
    %1174 = vmatprep.subr.mxu0 0.0
    %1175 = vmatpush1.msra.mxu0 %v1147
    %1176 = vmatprep.subr.mxu0 0.0
    %1177 = vmatpush1.msra.mxu0 %v1148
    %1178 = vmatprep.subr.mxu0 0.0
    %1179 = vmatpush1.msra.mxu0 %v1149
    %1180 = vmatprep.subr.mxu0 0.0
    %1181 = vmatpush1.msra.mxu0 %v1150
    %1182 = vmatprep.subr.mxu0 0.0
    %1183 = vmatpush1.msra.mxu0 %v1151
    %1184 = vmatprep.subr.mxu0 0.0
    %1185 = vmatpush1.msra.mxu0 0.0
    %1186 = vmatprep.subr.mxu0 0.0
    %1187 = vmatpush1.msra.mxu0 0.0
    %1188 = vmatprep.subr.mxu0 0.0
    %1189 = vmatpush1.msra.mxu0 0.0
    %1190 = vmatprep.subr.mxu0 0.0
    %1191 = vmatpush1.msra.mxu0 0.0
    %1192 = vmatprep.subr.mxu0 0.0
    %1193 = vmatpush1.msra.mxu0 0.0
    %1194 = vmatprep.subr.mxu0 0.0
    %1195 = vmatpush1.msra.mxu0 0.0
    %1196 = vmatprep.subr.mxu0 0.0
    %1197 = vmatpush1.msra.mxu0 0.0
    %1198 = vmatprep.subr.mxu0 0.0
    %1199 = vmatpush1.msra.mxu0 0.0
    %1200 = vmatprep.subr.mxu0 0.0
    %1201 = vmatpush1.msra.mxu0 0.0
    %1202 = vmatprep.subr.mxu0 0.0
    %1203 = vmatpush1.msra.mxu0 0.0
    %1204 = vmatprep.subr.mxu0 0.0
    %1205 = vmatpush1.msra.mxu0 0.0
    %1206 = vmatprep.subr.mxu0 0.0
    %1207 = vmatpush1.msra.mxu0 0.0
    %1208 = vmatprep.subr.mxu0 0.0
    %1209 = vmatpush1.msra.mxu0 0.0
    %1210 = vmatprep.subr.mxu0 0.0
    %1211 = vmatpush1.msra.mxu0 0.0
    %1212 = vmatprep.subr.mxu0 0.0
    %1213 = vmatpush1.msra.mxu0 0.0
    %1214 = vmatprep.subr.mxu0 0.0
    %1215 = vmatpush1.msra.mxu0 0.0
    %1216 = vmatprep.mubr.f32.mxu0 0.0
    %1217 = vmatmul.mubr.f32.gmra.mrb[0].mxu0 %v1130
    %v1218 = vpop.f32.mrb[0].mxu0
    %v1219 = vadd.f32 0.0, %v1218
    %v1220 = vpop.f32.mrb[0].mxu0
    %1221 = vmatprep.mubr.f32.mxu0 0.0
    %1222 = vmatmul.mubr.f32.gmra.mrb[0].mxu0 %v1131
    %v1223 = vpop.f32.mrb[0].mxu0
    %v1224 = vadd.f32 0.0, %v1223
    %v1225 = vpop.f32.mrb[0].mxu0
    %1226 = vmatprep.mubr.f32.mxu0 0.0
    %1227 = vmatmul.mubr.f32.gmra.mrb[0].mxu0 %v1132
    %v1228 = vpop.f32.mrb[0].mxu0
    %v1229 = vadd.f32 0.0, %v1228
    %v1230 = vpop.f32.mrb[0].mxu0
    %1231 = vmatprep.mubr.f32.mxu0 0.0
    %1232 = vmatmul.mubr.f32.gmra.mrb[0].mxu0 %v1133
    %v1233 = vpop.f32.mrb[0].mxu0
    %v1234 = vadd.f32 0.0, %v1233
    %v1235 = vpop.f32.mrb[0].mxu0
    %1236 = vmatprep.mubr.f32.mxu0 0.0
    %1237 = vmatmul.mubr.f32.gmra.mrb[0].mxu0 %v1134
    %v1238 = vpop.f32.mrb[0].mxu0
    %v1239 = vadd.f32 0.0, %v1238
    %v1240 = vpop.f32.mrb[0].mxu0
    %1241 = vdwg.mxu0
    %v1242 = vadd.f32 %v1107, %v1219
    %v1243 = vadd.f32 %v1112, %v1224
    %v1244 = vadd.f32 %v1117, %v1229
    %v1245 = vadd.f32 %v1122, %v1234
    %v1246 = vadd.f32 %v1127, %v1239
    %v1247 = vld [vmem:[%s6] sm:$0x1]
    %v1249 = vlaneseq
    %v1250 = vshrl.u32 %v1249, 7
    %v1251 = vsub.s32 0, %v1250
    %v1252 = vrot.slane %v1247, %v1251
    %v1254 = vadd.f32 %v1242, %v1252
    %v1255 = vadd.f32 %v1243, %v1252
    %v1256 = vadd.f32 %v1244, %v1252
    %v1257 = vadd.f32 %v1245, %v1252
    %v1258 = vadd.f32 %v1246, %v1252
    %v1259 = vld [vmem:[#allocation5] sm:$0xff]
    %v1260 = vld [vmem:[#allocation5 + $0x8] sm:$0xff]
    %v1261 = vadd.f32 %v1254, %v1259
    %v1262 = vadd.f32 %v1255, %v1260
    %v1263 = vmax.f32 %v1261, 0.0
    %v1264 = vmax.f32 %v1262, 0.0
    %1265 = vst [vmem:[#allocation14] sm:$0xff] %v1263
    %1266 = vst [vmem:[#allocation14 + $0x8] sm:$0xff] %v1264
    %v1267 = vld [vmem:[#allocation5 + $0x12] sm:$0xff]
    %v1268 = vld [vmem:[#allocation5 + $0x1a] sm:$0xff]
    %vm1271 = vcmask 1041408
    %v1272 = vrot.slane %v1267, 6
    %v1273 = vrot.slane %v1268, 6
    %v1274 = vsel %vm1271, %v1272, %v1273
    %v1278 = vadd.f32 %v1256, %v1272
    %v1279 = vadd.f32 %v1257, %v1274
    %v1280 = vadd.f32 %v1258, %v1273
    %v1281 = vmax.f32 %v1278, 0.0
    %v1282 = vmax.f32 %v1279, 0.0
    %v1283 = vmax.f32 %v1280, 0.0
    %s1284 = scalar_lea.vmem [#allocation14], 16
    %1285 = vst [vmem:[%s1284 - $0x2] sm:$0xfc] %v1281
    %1286 = vst [vmem:[%s1284 + $0x6] sm:$0xff] %v1282
    %1287 = vst [vmem:[%s1284 + $0xe] sm:$0x3] %v1283
    // Predicated region
    $region50: #{tpu_custom_call.1} parent=1 // pred_check
      _
    $region51: #{tpu_custom_call.1} parent=1 // pred_check_branch
      %1289 = sbr.rel (0) target = $region53
    $region52: #{tpu_custom_call.1} parent=1 // pred_region
      %s1291 = ssub.s32 512, 512
      %1292 = vsyncadd [#allocation8], %s1291
      %s1293 = sshll.u32 [#allocation14], 4
      %s1294 = int_to_ptr.vmem [resolvable:$true] %s1293
      %1299 = dma.vmem_to_hbm [thread:$0]  %s1294, 512, %s7, [#allocation8], 128, 128, 8
    $region53: #{tpu_custom_call.1} parent=1 // pred_fallthru
      _
    // Predicated region
    $region54: #{tpu_custom_call.1} parent=1 // pred_check
      _
    $region55: #{tpu_custom_call.1} parent=1 // pred_check_branch
      %1301 = sbr.rel (0) target = $region57
    $region56: #{tpu_custom_call.1} parent=1 // pred_region
      %1302 = dma.done [#allocation8], 512
    $region57: #{tpu_custom_call.1} parent=1 // pred_fallthru
      _
    %1303 = vsyncpa [#allocation7], 1
    %1304 = vsyncpa [#allocation10], 1
    %1305 = vsyncpa [#allocation13], 1
    %1306 = vsyncpa [#allocation8], 1

</llo_original>
